<compile_context>
chip_gen: v7x
topology: tpu7x:2x2x1
jax: 0.10.0
libtpu: 0.0.40
codegen_flags: <defaults>
</compile_context>

<pallas_src>
import functools

import jax
import jax.numpy as jnp
from jax import lax
from jax.experimental import pallas as pl
from jax.experimental.pallas import tpu as pltpu


def tasa_kernel(v_ref, ln_g_ref, ln_b_ref, wv_ref, bv_ref, wf_ref, bf_ref,
                whc_ref, out_ref, *, hidden_dim, length_in, length_out):
    f32 = jnp.float32
    bf16 = jnp.bfloat16
    H, L, Lo = hidden_dim, length_in, length_out
    Bt = v_ref.shape[0]                         # sequences in this grid step (static)
    M = Bt * L

    # ---- nn.LayerNorm(C_in) (eps=1e-5, biased variance); stats in f32 ----
    x = v_ref[...].astype(f32).reshape(M, -1)                   # [M, C_in]
    mean = jnp.mean(x, axis=-1, keepdims=True)
    var = jnp.mean((x - mean) ** 2, axis=-1, keepdims=True)
    xn = (x - mean) * lax.rsqrt(var + 1e-5)
    xn = xn * ln_g_ref[...] + ln_b_ref[...]

    # ---- ReLU(linear_V(x)) -> [M, 3H]; bf16 MXU operands, f32 accumulation ----
    vl = jnp.dot(xn.astype(bf16), wv_ref[...],
                 preferred_element_type=f32) + bv_ref[...]
    vl = jnp.maximum(vl, 0.0)                                   # f32 [M, 3H]
    v0 = vl[:, 0:H]                                             # [M, H]
    v1 = vl[:, H:2 * H].reshape(Bt, L, H)
    v2 = vl[:, 2 * H:3 * H].reshape(Bt, L, H)

    def roll_l(a, s):
        # jnp.roll(a, s, axis=1) per sequence (static shift): two static slices
        # + one concat; pure data movement, no MXU work, no doubled buffer.
        s = s % L
        if s == 0:
            return a
        return jnp.concatenate([a[:, L - s:, :], a[:, :L - s, :]], axis=1)

    # Circular conv taps: tap t (dilation d) reads V[(l + (t-1)*d) mod L],
    # i.e. roll(v, -(t-1)*d) -> shifts (+d, 0, -d) for t = 0, 1, 2.
    flat = lambda a: a.reshape(M, H)
    vfused = jnp.concatenate(
        [v0,
         flat(roll_l(v1, 1)), flat(v1), flat(roll_l(v1, -1)),
         flat(roll_l(v2, 2)), flat(v2), flat(roll_l(v2, -2))],
        axis=-1).astype(bf16)                                   # [M, 7H], single cast

    # ---- all three shorten kernels in one K=7H MXU push -> [M, 3Lo] ----
    sk = jnp.dot(vfused, wf_ref[...], preferred_element_type=f32) + bf_ref[...]
    sk = jnp.maximum(sk, 0.0)                                   # one bias+ReLU pass

    # ---- fused bmm + head_communicate ----
    # head_communicate is Linear(3, 1): out = sum_h w_h * (sk_h^T @ v_h) + b.
    # w_h is folded into sk_h after the ReLU (cannot be folded into the fused
    # weight), the heads are concatenated along L and contracted once over 3L
    # per sequence.
    w0, w1, w2, bh = whc_ref[0], whc_ref[1], whc_ref[2], whc_ref[3]
    skw = jnp.concatenate(
        [(w0 * sk[:, 0:Lo]).reshape(Bt, L, Lo),
         (w1 * sk[:, Lo:2 * Lo]).reshape(Bt, L, Lo),
         (w2 * sk[:, 2 * Lo:3 * Lo]).reshape(Bt, L, Lo)],
        axis=1).astype(bf16)                                    # [Bt, 3L, Lo]
    vcat = jnp.concatenate([v0.reshape(Bt, L, H), v1, v2],
                           axis=1).astype(bf16)                 # [Bt, 3L, H]

    dn = (((0,), (0,)), ((), ()))     # contract 3L; lone (small) lhs transpose -> XLU
    for b in range(Bt):               # static, unrolled at trace time
        ob = lax.dot_general(skw[b], vcat[b], dn,
                             preferred_element_type=f32)        # [Lo, H]
        out_ref[b] = (ob + bh).astype(out_ref.dtype)


def prepare_params(params, *, hidden_dim, length_out):
    """One-time host-side prep: build the block-structured fused shorten-kernel
    weight [7H, 3Lo] and pre-cast MXU weights to bf16 (no per-call casts)."""
    H, Lo = hidden_dim, length_out
    f32, bf16 = jnp.float32, jnp.bfloat16
    wf = jnp.zeros((7 * H, 3 * Lo), f32)
    wf = wf.at[0:H, 0:Lo].set(params["wd0"])                       # head-0 linear
    for t in range(3):                                             # conv taps (t=0,1,2)
        wf = wf.at[(1 + t) * H:(2 + t) * H, Lo:2 * Lo].set(params["wc1"][t])
        wf = wf.at[(4 + t) * H:(5 + t) * H, 2 * Lo:3 * Lo].set(params["wc2"][t])
    bf = jnp.concatenate([params["bd0"], params["bc1"], params["bc2"]], axis=-1)
    return dict(
        ln_g=params["ln_g"].astype(f32),
        ln_b=params["ln_b"].astype(f32),
        wv=params["wv"].astype(bf16),
        bv=params["bv"].astype(f32),
        wf=wf.astype(bf16),
        bf=bf.astype(f32),
        whc=params["whc"].astype(f32),
    )


@functools.partial(jax.jit, static_argnames=("hidden_dim", "length_out", "block_b"))
def target_aware_self_attention(Vb, prep, *, hidden_dim, length_out, block_b=4):
    """Batched forward: Vb is [B, L, C_in]; each sequence is processed exactly as
    Target_Aware_Self_Attention_Layer.forward (num_heads hard-wired to 3 there).
    Returns [B, length_out, hidden_dim]."""
    B, L, C_in = Vb.shape
    H, Lo = hidden_dim, length_out
    assert B % block_b == 0, "batch must be a multiple of block_b"
    assert L % 8 == 0, "length_in must be a multiple of 8 (sublane tile)"

    kernel = functools.partial(tasa_kernel, hidden_dim=H, length_in=L,
                               length_out=Lo)

    def const(shape):  # full-array block, constant index -> fetched once, VMEM-resident
        zeros = (0,) * len(shape)
        return pl.BlockSpec(shape, lambda b: zeros)

    flops = B * (2 * L * C_in * 3 * H          # linear_V
                 + 2 * L * 7 * H * 3 * Lo      # fused shorten kernels (K = 7H)
                 + 2 * 3 * L * Lo * H)         # fused bmm over 3L
    bytes_accessed = int(
        Vb.size * Vb.dtype.itemsize + B * Lo * H * 4
        + prep["wv"].size * 2 + prep["wf"].size * 2
        + (prep["ln_g"].size + prep["ln_b"].size + prep["bv"].size
           + prep["bf"].size + prep["whc"].size) * 4)

    return pl.pallas_call(
        kernel,
        out_shape=jax.ShapeDtypeStruct((B, Lo, H), jnp.float32),
        grid_spec=pltpu.PrefetchScalarGridSpec(
            num_scalar_prefetch=0,
            grid=(B // block_b,),
            in_specs=[
                pl.BlockSpec((block_b, L, C_in), lambda b: (b, 0, 0)),
                const((1, C_in)),            # LayerNorm gamma
                const((1, C_in)),            # LayerNorm beta
                const((C_in, 3 * H)),        # linear_V weight (bf16)
                const((1, 3 * H)),           # linear_V bias
                const((7 * H, 3 * Lo)),      # fused shorten-kernel weight (bf16)
                const((1, 3 * Lo)),          # fused shorten-kernel bias
                pl.BlockSpec(memory_space=pltpu.MemorySpace.SMEM),  # head_communicate [w0,w1,w2,b]
            ],
            out_specs=pl.BlockSpec((block_b, Lo, H), lambda b: (b, 0, 0)),
        ),
        compiler_params=pltpu.CompilerParams(
            dimension_semantics=("parallel",)),   # v7x: shard batch blocks over 2 TCs
        cost_estimate=pl.CostEstimate(
            flops=int(flops), transcendentals=int(B * L),
            bytes_accessed=bytes_accessed),
    )(Vb, prep["ln_g"], prep["ln_b"], prep["wv"], prep["bv"],
      prep["wf"], prep["bf"], prep["whc"])


def reference_jax(V, p, H, Lo):
    """Pure-JAX f32 restatement of the PyTorch forward (per sequence)."""
    mean = V.mean(-1, keepdims=True)
    var = ((V - mean) ** 2).mean(-1, keepdims=True)
    xn = (V - mean) / jnp.sqrt(var + 1e-5) * p["ln_g"] + p["ln_b"]
    vl = jax.nn.relu(xn @ p["wv"] + p["bv"])
    v0, v1, v2 = vl[:, :H], vl[:, H:2 * H], vl[:, 2 * H:]
    sk0 = jax.nn.relu(v0 @ p["wd0"] + p["bd0"])

    def circ(vh, wc, bc, d):
        acc = bc
        for t in range(3):
            acc = acc + jnp.roll(vh, -(t - 1) * d, axis=0) @ wc[t]
        return jax.nn.relu(acc)

    sk1 = circ(v1, p["wc1"], p["bc1"], 1)
    sk2 = circ(v2, p["wc2"], p["bc2"], 2)
    o0, o1, o2 = sk0.T @ v0, sk1.T @ v1, sk2.T @ v2
    w = p["whc"]
    return w[0] * o0 + w[1] * o1 + w[2] * o2 + w[3]


if __name__ == "__main__":
    # Small shapes consistent with the module: each sequence is [length_in, C_in];
    # num_heads is effectively 3 (the forward hard-codes heads 0/1/2).  A small
    # batch exercises the grid (2 steps of block_b=4 sequences).
    B, L, C_in, H, Lo = 8, 16, 32, 32, 8

    key = jax.random.PRNGKey(0)
    ks = jax.random.split(key, 12)
    Vb = jax.random.normal(ks[0], (B, L, C_in), jnp.float32)

    params = dict(
        ln_g=jnp.ones((1, C_in), jnp.float32),             # LayerNorm gamma
        ln_b=jnp.zeros((1, C_in), jnp.float32),            # LayerNorm beta
        wv=0.1 * jax.random.normal(ks[1], (C_in, 3 * H), jnp.float32),
        bv=0.1 * jax.random.normal(ks[2], (1, 3 * H), jnp.float32),
        wd0=0.1 * jax.random.normal(ks[3], (H, Lo), jnp.float32),
        bd0=0.1 * jax.random.normal(ks[4], (1, Lo), jnp.float32),
        # Conv1d weights stored as [tap, H, Lo] (== torch weight[:, :, t].T per tap)
        wc1=0.1 * jax.random.normal(ks[5], (3, H, Lo), jnp.float32),
        bc1=0.1 * jax.random.normal(ks[6], (1, Lo), jnp.float32),
        wc2=0.1 * jax.random.normal(ks[7], (3, H, Lo), jnp.float32),
        bc2=0.1 * jax.random.normal(ks[8], (1, Lo), jnp.float32),
        # head_communicate Linear(3, 1): [w0, w1, w2, bias]
        whc=jnp.concatenate([
            0.5 * jax.random.normal(ks[9], (3,), jnp.float32),
            0.1 * jax.random.normal(ks[10], (1,), jnp.float32),
        ]),
    )
    # NOTE: nn.Dropout is declared in __init__ but never applied in forward.

    prep = prepare_params(params, hidden_dim=H, length_out=Lo)  # one-time host prep
    out = target_aware_self_attention(Vb, prep, hidden_dim=H, length_out=Lo,
                                      block_b=4)
    out = jax.block_until_ready(out)

    ref = jax.vmap(lambda v: reference_jax(v, params, H, Lo))(Vb)
    assert out.shape == (B, Lo, H)
    max_err = jnp.max(jnp.abs(out - ref))
    # bf16 MXU operands (f32 accumulation) => loose tolerance vs the f32 reference.
    assert jnp.allclose(out, ref, atol=5e-2, rtol=5e-2), f"max abs err {max_err}"

    print("KERNEL_OK")
</pallas_src>

<mosaic_0001>
module attributes {stable_mosaic.version = 11 : i64} {
  func.func @tasa_kernel(%arg0: i32, %arg1: memref<4x16x32xf32, #tpu.memory_space<vmem>>, %arg2: memref<1x32xf32, #tpu.memory_space<vmem>>, %arg3: memref<1x32xf32, #tpu.memory_space<vmem>>, %arg4: memref<32x96xbf16, #tpu.memory_space<vmem>>, %arg5: memref<1x96xf32, #tpu.memory_space<vmem>>, %arg6: memref<224x24xbf16, #tpu.memory_space<vmem>>, %arg7: memref<1x24xf32, #tpu.memory_space<vmem>>, %arg8: memref<4xf32, #tpu.memory_space<smem>>, %arg9: memref<4x8x32xf32, #tpu.memory_space<vmem>>) attributes {dimension_semantics = [#tpu.dimension_semantics<parallel>], iteration_bounds = array<i64: 2>, scalar_prefetch = 0 : i64, scratch_operands = 0 : i64, tpu.core_type = #tpu.core_type<tc>, window_params = [{transform_indices = @transform_0, window_bounds = array<i64: 4, 16, 32>}, {pipeline_mode = #tpu.pipeline_mode<synchronous>, transform_indices = @transform_1, window_bounds = array<i64: 1, 32>}, {pipeline_mode = #tpu.pipeline_mode<synchronous>, transform_indices = @transform_2, window_bounds = array<i64: 1, 32>}, {pipeline_mode = #tpu.pipeline_mode<synchronous>, transform_indices = @transform_3, window_bounds = array<i64: 32, 96>}, {pipeline_mode = #tpu.pipeline_mode<synchronous>, transform_indices = @transform_4, window_bounds = array<i64: 1, 96>}, {pipeline_mode = #tpu.pipeline_mode<synchronous>, transform_indices = @transform_5, window_bounds = array<i64: 224, 24>}, {pipeline_mode = #tpu.pipeline_mode<synchronous>, transform_indices = @transform_6, window_bounds = array<i64: 1, 24>}, {transform_indices = @transform_7, window_bounds = array<i64: 4>}, {transform_indices = @transform_8, window_bounds = array<i64: 4, 8, 32>}]} {
    %c0 = arith.constant 0 : index
    %c0_0 = arith.constant 0 : index
    %c0_1 = arith.constant 0 : index
    %0 = vector.load %arg1[%c0, %c0_0, %c0_1] : memref<4x16x32xf32, #tpu.memory_space<vmem>>, vector<4x16x32xf32>
    %1 = vector.shape_cast %0 : vector<4x16x32xf32> to vector<64x32xf32>
    %cst = arith.constant dense<0.000000e+00> : vector<64xf32>
    %2 = vector.multi_reduction <add>, %1, %cst [1] : vector<64x32xf32> to vector<64xf32>
    %3 = vector.shape_cast %2 : vector<64xf32> to vector<64x1xf32>
    %cst_2 = arith.constant 3.200000e+01 : f32
    %4 = vector.broadcast %cst_2 : f32 to vector<64x1xf32>
    %5 = arith.divf %3, %4 : vector<64x1xf32>
    %6 = vector.broadcast %5 : vector<64x1xf32> to vector<64x32xf32>
    %7 = arith.subf %1, %6 : vector<64x32xf32>
    %8 = arith.mulf %7, %7 : vector<64x32xf32>
    %cst_3 = arith.constant dense<0.000000e+00> : vector<64xf32>
    %9 = vector.multi_reduction <add>, %8, %cst_3 [1] : vector<64x32xf32> to vector<64xf32>
    %10 = vector.shape_cast %9 : vector<64xf32> to vector<64x1xf32>
    %cst_4 = arith.constant 3.200000e+01 : f32
    %11 = vector.broadcast %cst_4 : f32 to vector<64x1xf32>
    %12 = arith.divf %10, %11 : vector<64x1xf32>
    %13 = vector.broadcast %5 : vector<64x1xf32> to vector<64x32xf32>
    %14 = arith.subf %1, %13 : vector<64x32xf32>
    %cst_5 = arith.constant 9.99999974E-6 : f32
    %15 = vector.broadcast %cst_5 : f32 to vector<64x1xf32>
    %16 = arith.addf %12, %15 : vector<64x1xf32>
    %17 = math.rsqrt %16 : vector<64x1xf32>
    %18 = vector.broadcast %17 : vector<64x1xf32> to vector<64x32xf32>
    %19 = arith.mulf %14, %18 : vector<64x32xf32>
    %c0_6 = arith.constant 0 : index
    %c0_7 = arith.constant 0 : index
    %20 = vector.load %arg2[%c0_6, %c0_7] : memref<1x32xf32, #tpu.memory_space<vmem>>, vector<1x32xf32>
    %21 = vector.broadcast %20 : vector<1x32xf32> to vector<64x32xf32>
    %22 = arith.mulf %19, %21 : vector<64x32xf32>
    %c0_8 = arith.constant 0 : index
    %c0_9 = arith.constant 0 : index
    %23 = vector.load %arg3[%c0_8, %c0_9] : memref<1x32xf32, #tpu.memory_space<vmem>>, vector<1x32xf32>
    %24 = vector.broadcast %23 : vector<1x32xf32> to vector<64x32xf32>
    %25 = arith.addf %22, %24 : vector<64x32xf32>
    %26 = arith.truncf %25 : vector<64x32xf32> to vector<64x32xbf16>
    %c0_10 = arith.constant 0 : index
    %c0_11 = arith.constant 0 : index
    %27 = vector.load %arg4[%c0_10, %c0_11] : memref<32x96xbf16, #tpu.memory_space<vmem>>, vector<32x96xbf16>
    %cst_12 = arith.constant dense<0.000000e+00> : vector<64x96xf32>
    %28 = tpu.matmul %26, %27, %cst_12 {dimension_numbers = #tpu.dot_dimension_numbers<[1], [0], [0], [1], [0, 0, 1, 1], [], []>} : vector<64x32xbf16>, vector<32x96xbf16>, vector<64x96xf32> -> vector<64x96xf32>
    %c0_13 = arith.constant 0 : index
    %c0_14 = arith.constant 0 : index
    %29 = vector.load %arg5[%c0_13, %c0_14] : memref<1x96xf32, #tpu.memory_space<vmem>>, vector<1x96xf32>
    %30 = vector.broadcast %29 : vector<1x96xf32> to vector<64x96xf32>
    %31 = arith.addf %28, %30 : vector<64x96xf32>
    %cst_15 = arith.constant 0.000000e+00 : f32
    %32 = vector.broadcast %cst_15 : f32 to vector<64x96xf32>
    %33 = arith.maximumf %31, %32 : vector<64x96xf32>
    %34 = vector.extract_strided_slice %33 {offsets = [0, 0], sizes = [64, 32], strides = [1, 1]} : vector<64x96xf32> to vector<64x32xf32>
    %35 = vector.extract_strided_slice %33 {offsets = [0, 32], sizes = [64, 32], strides = [1, 1]} : vector<64x96xf32> to vector<64x32xf32>
    %36 = vector.shape_cast %35 : vector<64x32xf32> to vector<4x16x32xf32>
    %37 = vector.extract_strided_slice %33 {offsets = [0, 64], sizes = [64, 32], strides = [1, 1]} : vector<64x96xf32> to vector<64x32xf32>
    %38 = vector.shape_cast %37 : vector<64x32xf32> to vector<4x16x32xf32>
    %39 = vector.extract_strided_slice %36 {offsets = [0, 15, 0], sizes = [4, 1, 32], strides = [1, 1, 1]} : vector<4x16x32xf32> to vector<4x1x32xf32>
    %40 = vector.extract_strided_slice %36 {offsets = [0, 0, 0], sizes = [4, 15, 32], strides = [1, 1, 1]} : vector<4x16x32xf32> to vector<4x15x32xf32>
    %41 = tpu.concatenate %39, %40 in 1 : vector<4x1x32xf32>, vector<4x15x32xf32> -> vector<4x16x32xf32>
    %42 = vector.shape_cast %41 : vector<4x16x32xf32> to vector<64x32xf32>
    %43 = vector.shape_cast %36 : vector<4x16x32xf32> to vector<64x32xf32>
    %44 = vector.extract_strided_slice %36 {offsets = [0, 1, 0], sizes = [4, 15, 32], strides = [1, 1, 1]} : vector<4x16x32xf32> to vector<4x15x32xf32>
    %45 = vector.extract_strided_slice %36 {offsets = [0, 0, 0], sizes = [4, 1, 32], strides = [1, 1, 1]} : vector<4x16x32xf32> to vector<4x1x32xf32>
    %46 = tpu.concatenate %44, %45 in 1 : vector<4x15x32xf32>, vector<4x1x32xf32> -> vector<4x16x32xf32>
    %47 = vector.shape_cast %46 : vector<4x16x32xf32> to vector<64x32xf32>
    %48 = vector.extract_strided_slice %38 {offsets = [0, 14, 0], sizes = [4, 2, 32], strides = [1, 1, 1]} : vector<4x16x32xf32> to vector<4x2x32xf32>
    %49 = vector.extract_strided_slice %38 {offsets = [0, 0, 0], sizes = [4, 14, 32], strides = [1, 1, 1]} : vector<4x16x32xf32> to vector<4x14x32xf32>
    %50 = tpu.concatenate %48, %49 in 1 : vector<4x2x32xf32>, vector<4x14x32xf32> -> vector<4x16x32xf32>
    %51 = vector.shape_cast %50 : vector<4x16x32xf32> to vector<64x32xf32>
    %52 = vector.shape_cast %38 : vector<4x16x32xf32> to vector<64x32xf32>
    %53 = vector.extract_strided_slice %38 {offsets = [0, 2, 0], sizes = [4, 14, 32], strides = [1, 1, 1]} : vector<4x16x32xf32> to vector<4x14x32xf32>
    %54 = vector.extract_strided_slice %38 {offsets = [0, 0, 0], sizes = [4, 2, 32], strides = [1, 1, 1]} : vector<4x16x32xf32> to vector<4x2x32xf32>
    %55 = tpu.concatenate %53, %54 in 1 : vector<4x14x32xf32>, vector<4x2x32xf32> -> vector<4x16x32xf32>
    %56 = vector.shape_cast %55 : vector<4x16x32xf32> to vector<64x32xf32>
    %57 = tpu.concatenate %34, %42, %43, %47, %51, %52, %56 in 1 : vector<64x32xf32>, vector<64x32xf32>, vector<64x32xf32>, vector<64x32xf32>, vector<64x32xf32>, vector<64x32xf32>, vector<64x32xf32> -> vector<64x224xf32>
    %58 = arith.truncf %57 : vector<64x224xf32> to vector<64x224xbf16>
    %c0_16 = arith.constant 0 : index
    %c0_17 = arith.constant 0 : index
    %59 = vector.load %arg6[%c0_16, %c0_17] : memref<224x24xbf16, #tpu.memory_space<vmem>>, vector<224x24xbf16>
    %cst_18 = arith.constant dense<0.000000e+00> : vector<64x24xf32>
    %60 = tpu.matmul %58, %59, %cst_18 {dimension_numbers = #tpu.dot_dimension_numbers<[1], [0], [0], [1], [0, 0, 1, 1], [], []>} : vector<64x224xbf16>, vector<224x24xbf16>, vector<64x24xf32> -> vector<64x24xf32>
    %c0_19 = arith.constant 0 : index
    %c0_20 = arith.constant 0 : index
    %61 = vector.load %arg7[%c0_19, %c0_20] : memref<1x24xf32, #tpu.memory_space<vmem>>, vector<1x24xf32>
    %62 = vector.broadcast %61 : vector<1x24xf32> to vector<64x24xf32>
    %63 = arith.addf %60, %62 : vector<64x24xf32>
    %cst_21 = arith.constant 0.000000e+00 : f32
    %64 = vector.broadcast %cst_21 : f32 to vector<64x24xf32>
    %65 = arith.maximumf %63, %64 : vector<64x24xf32>
    %c0_22 = arith.constant 0 : index
    %66 = memref.load %arg8[%c0_22] : memref<4xf32, #tpu.memory_space<smem>>
    %c1 = arith.constant 1 : index
    %67 = memref.load %arg8[%c1] : memref<4xf32, #tpu.memory_space<smem>>
    %c2 = arith.constant 2 : index
    %68 = memref.load %arg8[%c2] : memref<4xf32, #tpu.memory_space<smem>>
    %c3 = arith.constant 3 : index
    %69 = memref.load %arg8[%c3] : memref<4xf32, #tpu.memory_space<smem>>
    %70 = vector.extract_strided_slice %65 {offsets = [0, 0], sizes = [64, 8], strides = [1, 1]} : vector<64x24xf32> to vector<64x8xf32>
    %71 = vector.broadcast %66 : f32 to vector<64x8xf32>
    %72 = arith.mulf %71, %70 : vector<64x8xf32>
    %73 = vector.shape_cast %72 : vector<64x8xf32> to vector<4x16x8xf32>
    %74 = vector.extract_strided_slice %65 {offsets = [0, 8], sizes = [64, 8], strides = [1, 1]} : vector<64x24xf32> to vector<64x8xf32>
    %75 = vector.broadcast %67 : f32 to vector<64x8xf32>
    %76 = arith.mulf %75, %74 : vector<64x8xf32>
    %77 = vector.shape_cast %76 : vector<64x8xf32> to vector<4x16x8xf32>
    %78 = vector.extract_strided_slice %65 {offsets = [0, 16], sizes = [64, 8], strides = [1, 1]} : vector<64x24xf32> to vector<64x8xf32>
    %79 = vector.broadcast %68 : f32 to vector<64x8xf32>
    %80 = arith.mulf %79, %78 : vector<64x8xf32>
    %81 = vector.shape_cast %80 : vector<64x8xf32> to vector<4x16x8xf32>
    %82 = tpu.concatenate %73, %77, %81 in 1 : vector<4x16x8xf32>, vector<4x16x8xf32>, vector<4x16x8xf32> -> vector<4x48x8xf32>
    %83 = arith.truncf %82 : vector<4x48x8xf32> to vector<4x48x8xbf16>
    %84 = vector.shape_cast %34 : vector<64x32xf32> to vector<4x16x32xf32>
    %85 = tpu.concatenate %84, %36, %38 in 1 : vector<4x16x32xf32>, vector<4x16x32xf32>, vector<4x16x32xf32> -> vector<4x48x32xf32>
    %86 = arith.truncf %85 : vector<4x48x32xf32> to vector<4x48x32xbf16>
    %87 = vector.extract_strided_slice %83 {offsets = [0, 0, 0], sizes = [1, 48, 8], strides = [1, 1, 1]} : vector<4x48x8xbf16> to vector<1x48x8xbf16>
    %88 = vector.shape_cast %87 : vector<1x48x8xbf16> to vector<48x8xbf16>
    %89 = vector.extract_strided_slice %86 {offsets = [0, 0, 0], sizes = [1, 48, 32], strides = [1, 1, 1]} : vector<4x48x32xbf16> to vector<1x48x32xbf16>
    %90 = vector.shape_cast %89 : vector<1x48x32xbf16> to vector<48x32xbf16>
    %cst_23 = arith.constant dense<0.000000e+00> : vector<8x32xf32>
    %91 = tpu.matmul %88, %90, %cst_23 {dimension_numbers = #tpu.dot_dimension_numbers<[0], [0], [1], [1], [0, 1, 1, 1], [], []>} : vector<48x8xbf16>, vector<48x32xbf16>, vector<8x32xf32> -> vector<8x32xf32>
    %92 = vector.broadcast %69 : f32 to vector<8x32xf32>
    %93 = arith.addf %91, %92 : vector<8x32xf32>
    %c0_24 = arith.constant 0 : index
    %c0_25 = arith.constant 0 : index
    %c0_26 = arith.constant 0 : index
    %94 = vector.load %arg9[%c0_24, %c0_25, %c0_26] : memref<4x8x32xf32, #tpu.memory_space<vmem>>, vector<1x8x32xf32>
    %95 = vector.shape_cast %94 : vector<1x8x32xf32> to vector<8x32xf32>
    %96 = vector.shape_cast %93 : vector<8x32xf32> to vector<1x8x32xf32>
    tpu.vector_store %arg9[%c0_24, %c0_25, %c0_26], %96 {strides = array<i32>} : memref<4x8x32xf32, #tpu.memory_space<vmem>>, vector<1x8x32xf32>,
    %97 = vector.extract_strided_slice %83 {offsets = [1, 0, 0], sizes = [1, 48, 8], strides = [1, 1, 1]} : vector<4x48x8xbf16> to vector<1x48x8xbf16>
    %98 = vector.shape_cast %97 : vector<1x48x8xbf16> to vector<48x8xbf16>
    %99 = vector.extract_strided_slice %86 {offsets = [1, 0, 0], sizes = [1, 48, 32], strides = [1, 1, 1]} : vector<4x48x32xbf16> to vector<1x48x32xbf16>
    %100 = vector.shape_cast %99 : vector<1x48x32xbf16> to vector<48x32xbf16>
    %cst_27 = arith.constant dense<0.000000e+00> : vector<8x32xf32>
    %101 = tpu.matmul %98, %100, %cst_27 {dimension_numbers = #tpu.dot_dimension_numbers<[0], [0], [1], [1], [0, 1, 1, 1], [], []>} : vector<48x8xbf16>, vector<48x32xbf16>, vector<8x32xf32> -> vector<8x32xf32>
    %102 = vector.broadcast %69 : f32 to vector<8x32xf32>
    %103 = arith.addf %101, %102 : vector<8x32xf32>
    %c1_28 = arith.constant 1 : index
    %c0_29 = arith.constant 0 : index
    %c0_30 = arith.constant 0 : index
    %104 = vector.load %arg9[%c1_28, %c0_29, %c0_30] : memref<4x8x32xf32, #tpu.memory_space<vmem>>, vector<1x8x32xf32>
    %105 = vector.shape_cast %104 : vector<1x8x32xf32> to vector<8x32xf32>
    %106 = vector.shape_cast %103 : vector<8x32xf32> to vector<1x8x32xf32>
    tpu.vector_store %arg9[%c1_28, %c0_29, %c0_30], %106 {strides = array<i32>} : memref<4x8x32xf32, #tpu.memory_space<vmem>>, vector<1x8x32xf32>,
    %107 = vector.extract_strided_slice %83 {offsets = [2, 0, 0], sizes = [1, 48, 8], strides = [1, 1, 1]} : vector<4x48x8xbf16> to vector<1x48x8xbf16>
    %108 = vector.shape_cast %107 : vector<1x48x8xbf16> to vector<48x8xbf16>
    %109 = vector.extract_strided_slice %86 {offsets = [2, 0, 0], sizes = [1, 48, 32], strides = [1, 1, 1]} : vector<4x48x32xbf16> to vector<1x48x32xbf16>
    %110 = vector.shape_cast %109 : vector<1x48x32xbf16> to vector<48x32xbf16>
    %cst_31 = arith.constant dense<0.000000e+00> : vector<8x32xf32>
    %111 = tpu.matmul %108, %110, %cst_31 {dimension_numbers = #tpu.dot_dimension_numbers<[0], [0], [1], [1], [0, 1, 1, 1], [], []>} : vector<48x8xbf16>, vector<48x32xbf16>, vector<8x32xf32> -> vector<8x32xf32>
    %112 = vector.broadcast %69 : f32 to vector<8x32xf32>
    %113 = arith.addf %111, %112 : vector<8x32xf32>
    %c2_32 = arith.constant 2 : index
    %c0_33 = arith.constant 0 : index
    %c0_34 = arith.constant 0 : index
    %114 = vector.load %arg9[%c2_32, %c0_33, %c0_34] : memref<4x8x32xf32, #tpu.memory_space<vmem>>, vector<1x8x32xf32>
    %115 = vector.shape_cast %114 : vector<1x8x32xf32> to vector<8x32xf32>
    %116 = vector.shape_cast %113 : vector<8x32xf32> to vector<1x8x32xf32>
    tpu.vector_store %arg9[%c2_32, %c0_33, %c0_34], %116 {strides = array<i32>} : memref<4x8x32xf32, #tpu.memory_space<vmem>>, vector<1x8x32xf32>,
    %117 = vector.extract_strided_slice %83 {offsets = [3, 0, 0], sizes = [1, 48, 8], strides = [1, 1, 1]} : vector<4x48x8xbf16> to vector<1x48x8xbf16>
    %118 = vector.shape_cast %117 : vector<1x48x8xbf16> to vector<48x8xbf16>
    %119 = vector.extract_strided_slice %86 {offsets = [3, 0, 0], sizes = [1, 48, 32], strides = [1, 1, 1]} : vector<4x48x32xbf16> to vector<1x48x32xbf16>
    %120 = vector.shape_cast %119 : vector<1x48x32xbf16> to vector<48x32xbf16>
    %cst_35 = arith.constant dense<0.000000e+00> : vector<8x32xf32>
    %121 = tpu.matmul %118, %120, %cst_35 {dimension_numbers = #tpu.dot_dimension_numbers<[0], [0], [1], [1], [0, 1, 1, 1], [], []>} : vector<48x8xbf16>, vector<48x32xbf16>, vector<8x32xf32> -> vector<8x32xf32>
    %122 = vector.broadcast %69 : f32 to vector<8x32xf32>
    %123 = arith.addf %121, %122 : vector<8x32xf32>
    %c3_36 = arith.constant 3 : index
    %c0_37 = arith.constant 0 : index
    %c0_38 = arith.constant 0 : index
    %124 = vector.load %arg9[%c3_36, %c0_37, %c0_38] : memref<4x8x32xf32, #tpu.memory_space<vmem>>, vector<1x8x32xf32>
    %125 = vector.shape_cast %124 : vector<1x8x32xf32> to vector<8x32xf32>
    %126 = vector.shape_cast %123 : vector<8x32xf32> to vector<1x8x32xf32>
    tpu.vector_store %arg9[%c3_36, %c0_37, %c0_38], %126 {strides = array<i32>} : memref<4x8x32xf32, #tpu.memory_space<vmem>>, vector<1x8x32xf32>,
    return
  }
  func.func @transform_0(%arg0: i32) -> (i32, i32, i32) {
    %c0_i32 = arith.constant 0 : i32
    %c0_i32_0 = arith.constant 0 : i32
    %c0_i32_1 = arith.constant 0 : i32
    return %arg0, %c0_i32, %c0_i32_0 : i32, i32, i32
  }
  func.func @transform_1(%arg0: i32) -> (i32, i32) {
    %c0_i32 = arith.constant 0 : i32
    %c0_i32_0 = arith.constant 0 : i32
    %c0_i32_1 = arith.constant 0 : i32
    return %c0_i32, %c0_i32_0 : i32, i32
  }
  func.func @transform_2(%arg0: i32) -> (i32, i32) {
    %c0_i32 = arith.constant 0 : i32
    %c0_i32_0 = arith.constant 0 : i32
    %c0_i32_1 = arith.constant 0 : i32
    return %c0_i32, %c0_i32_0 : i32, i32
  }
  func.func @transform_3(%arg0: i32) -> (i32, i32) {
    %c0_i32 = arith.constant 0 : i32
    %c0_i32_0 = arith.constant 0 : i32
    %c0_i32_1 = arith.constant 0 : i32
    return %c0_i32, %c0_i32_0 : i32, i32
  }
  func.func @transform_4(%arg0: i32) -> (i32, i32) {
    %c0_i32 = arith.constant 0 : i32
    %c0_i32_0 = arith.constant 0 : i32
    %c0_i32_1 = arith.constant 0 : i32
    return %c0_i32, %c0_i32_0 : i32, i32
  }
  func.func @transform_5(%arg0: i32) -> (i32, i32) {
    %c0_i32 = arith.constant 0 : i32
    %c0_i32_0 = arith.constant 0 : i32
    %c0_i32_1 = arith.constant 0 : i32
    return %c0_i32, %c0_i32_0 : i32, i32
  }
  func.func @transform_6(%arg0: i32) -> (i32, i32) {
    %c0_i32 = arith.constant 0 : i32
    %c0_i32_0 = arith.constant 0 : i32
    %c0_i32_1 = arith.constant 0 : i32
    return %c0_i32, %c0_i32_0 : i32, i32
  }
  func.func @transform_7(%arg0: i32) -> i32 {
    %c0_i32 = arith.constant 0 : i32
    %c0_i32_0 = arith.constant 0 : i32
    return %c0_i32 : i32
  }
  func.func @transform_8(%arg0: i32) -> (i32, i32, i32) {
    %c0_i32 = arith.constant 0 : i32
    %c0_i32_0 = arith.constant 0 : i32
    %c0_i32_1 = arith.constant 0 : i32
    return %arg0, %c0_i32, %c0_i32_0 : i32, i32, i32
  }
}

</mosaic_0001>

<llo_original>
// kernel: target_aware_self_attention.1
$region0: #{target_aware_self_attention.1}
  #allocation0 [shape = 'u32[]', space=smem, size = 0x4, offset = 0x4, fixed_abs, tag = 'smem constant byte address 0x4 - core index']
  #allocation1 [shape = 'u32[144,128]{1,0:T(1,128)}', space=vmem, size = 0x12000, scoped, tag = 'internal scratch']
  %s0 = inlined_call_operand.vmem [shape: f32[8,16,32], index: 0, kind: input, shape index: {}]
  %s1 = inlined_call_operand.vmem [shape: f32[1,32], index: 1, kind: input, shape index: {}]
  %s2 = inlined_call_operand.vmem [shape: f32[1,32], index: 2, kind: input, shape index: {}]
  %s3 = inlined_call_operand.vmem [shape: bf16[32,96], index: 3, kind: input, shape index: {}]
  %s4 = inlined_call_operand.vmem [shape: f32[1,96], index: 4, kind: input, shape index: {}]
  %s5 = inlined_call_operand.vmem [shape: bf16[224,24], index: 5, kind: input, shape index: {}]
  %s6 = inlined_call_operand.hbm [shape: f32[1,24], index: 6, kind: input, shape index: {}]
  %s7 = inlined_call_operand.vmem [shape: f32[4], index: 7, kind: input, shape index: {}]
  %s8 = inlined_call_operand.hbm [shape: f32[8,8,32], index: 8, kind: output, shape index: {}]
  %s9 = sld [smem:[#allocation0]]
  $region73: #{target_aware_self_attention.1} parent=0
    _
  %s11 = ssub.s32 1, %s9
  %s12 = scalar_select 0, %s11, %s9
  $region1: #{target_aware_self_attention.1} parent=0
    #allocation2 [shape = 'u8[512]{0}', space=vmem, size = 0x400, scoped, tag = 'input window, operand 6, single buffered']
    #allocation3 [shape = 's32[2]{0}', space=sflag, size = 0x8, scoped, tag = 'scoped memory for target_aware_self_attention.1']
    #allocation4 [shape = 's32[2]{0}', space=sflag, size = 0x8, scoped, tag = 'scoped memory for target_aware_self_attention.1']
    #allocation5 [shape = 's32[2]{0}', space=sflag, size = 0x8, scoped, tag = 'scoped memory for target_aware_self_attention.1']
    #allocation6 [shape = 'u8[512]{0}', space=smem, size = 0x200, scoped, tag = 'input window, operand 7, single buffered']
    #allocation7 [shape = 'u8[32768]{0}', space=vmem, size = 0x8000, scoped, tag = 'output window, operand 0']
    %13 = vsyncpa [#allocation3], 0
    %14 = vsyncpa [#allocation5], 0
    %15 = vsyncpa [#allocation4], 0
    %s16 = scalar_lea.sflag [#allocation4], 1
    %17 = vsyncpa %s16, 0
    loop: start=0, step=1, limit=4
    $region2: #{target_aware_self_attention.1} parent=1 // loop_pre_header
      _
    $region3: #{target_aware_self_attention.1} parent=1 // loop_header
      %s19 = sphi 0, %s23
      %p20 = scmp.ge.s32.totalorder %s19, 4
      %s29 = sphi 0, %s31
      %s32 = sphi 0, %s29
      %s33 = sphi 0, %s32
      %s49 = sphi 0, %s33
      %s53 = sphi 0, %s53
      %s55 = sphi 0, %s53
      %s56 = sphi 0, %s55
      %s70 = sphi 0, %s56
      %s74 = sphi 0, %s74
      %s76 = sphi 0, %s74
      %s77 = sphi 0, %s76
      %s91 = sphi 0, %s77
      %s95 = sphi 0, %s95
      %s97 = sphi 0, %s95
      %s98 = sphi 0, %s97
      %s112 = sphi 0, %s98
      %s116 = sphi 0, %s116
      %s118 = sphi 0, %s116
      %s119 = sphi 0, %s118
      %s133 = sphi 0, %s119
      %s137 = sphi 0, %s137
      %s139 = sphi 0, %s137
      %s140 = sphi 0, %s139
      %s154 = sphi 0, %s140
      %s158 = sphi 0, %s158
      %s160 = sphi 0, %s158
      %s161 = sphi 0, %s160
      %s175 = sphi 0, %s161
      %s179 = sphi 0, %s179
      %s181 = sphi 0, %s179
      %s182 = sphi 0, %s181
      %s196 = sphi 0, %s182
      %s202 = sphi 0, %s204
      %s205 = sphi 0, %s202
      %s206 = sphi 0, %s205
      %s222 = sphi 0, %s206
    $region4: #{target_aware_self_attention.1} parent=1 // loop_header_branch
      %22 = sbr.rel (%p20) target = $region8
    $region5: #{target_aware_self_attention.1} parent=1 // loop_body
      %s24 = ssub.s32 %s19, 1
      %s25 = ssub.s32 %s19, 2
      %s26 = sadd.s32 %s19, 1
      %s27 = ssub.s32 %s19, %s26
      %p28 = scmp.eq.s32.totalorder %s27, 0
      %s30 = sadd.s32 %s29, 1
      %s31 = scalar_select %p28, %s29, %s30
      %p34 = pneg %p28
      %p35 = scmp.eq.s32.totalorder %s19, 1
      %p36 = por %p34, %p35
      %p37 = scmp.ne.s32.totalorder %s29, %s32
      %p38 = scmp.eq.s32.totalorder %s19, 0
      %p39 = por %p37, %p38
      %p40 = scmp.ne.s32.totalorder %s29, %s32
      %p41 = scmp.eq.s32.totalorder %s24, 1
      %p42 = por %p40, %p41
      %p43 = scmp.ne.s32.totalorder %s32, %s33
      %p44 = scmp.eq.s32.totalorder %s24, 0
      %p45 = por %p43, %p44
      %p46 = scmp.ne.s32.totalorder %s32, %s33
      %p47 = scmp.eq.s32.totalorder %s25, 1
      %p48 = por %p46, %p47
      %p50 = scmp.ne.s32.totalorder %s33, %s49
      %p51 = scmp.eq.s32.totalorder %s25, 0
      %p52 = por %p50, %p51
      %s54 = sadd.s32 %s53, 1
      %p57 = scmp.eq.s32.totalorder %s19, 1
      %p58 = scmp.ne.s32.totalorder %s53, %s55
      %p59 = scmp.eq.s32.totalorder %s19, 0
      %p60 = por %p58, %p59
      %p61 = scmp.ne.s32.totalorder %s53, %s55
      %p62 = scmp.eq.s32.totalorder %s24, 1
      %p63 = por %p61, %p62
      %p64 = scmp.ne.s32.totalorder %s55, %s56
      %p65 = scmp.eq.s32.totalorder %s24, 0
      %p66 = por %p64, %p65
      %p67 = scmp.ne.s32.totalorder %s55, %s56
      %p68 = scmp.eq.s32.totalorder %s25, 1
      %p69 = por %p67, %p68
      %p71 = scmp.ne.s32.totalorder %s56, %s70
      %p72 = scmp.eq.s32.totalorder %s25, 0
      %p73 = por %p71, %p72
      %s75 = sadd.s32 %s74, 1
      %p78 = scmp.eq.s32.totalorder %s19, 1
      %p79 = scmp.ne.s32.totalorder %s74, %s76
      %p80 = scmp.eq.s32.totalorder %s19, 0
      %p81 = por %p79, %p80
      %p82 = scmp.ne.s32.totalorder %s74, %s76
      %p83 = scmp.eq.s32.totalorder %s24, 1
      %p84 = por %p82, %p83
      %p85 = scmp.ne.s32.totalorder %s76, %s77
      %p86 = scmp.eq.s32.totalorder %s24, 0
      %p87 = por %p85, %p86
      %p88 = scmp.ne.s32.totalorder %s76, %s77
      %p89 = scmp.eq.s32.totalorder %s25, 1
      %p90 = por %p88, %p89
      %p92 = scmp.ne.s32.totalorder %s77, %s91
      %p93 = scmp.eq.s32.totalorder %s25, 0
      %p94 = por %p92, %p93
      %s96 = sadd.s32 %s95, 1
      %p99 = scmp.eq.s32.totalorder %s19, 1
      %p100 = scmp.ne.s32.totalorder %s95, %s97
      %p101 = scmp.eq.s32.totalorder %s19, 0
      %p102 = por %p100, %p101
      %p103 = scmp.ne.s32.totalorder %s95, %s97
      %p104 = scmp.eq.s32.totalorder %s24, 1
      %p105 = por %p103, %p104
      %p106 = scmp.ne.s32.totalorder %s97, %s98
      %p107 = scmp.eq.s32.totalorder %s24, 0
      %p108 = por %p106, %p107
      %p109 = scmp.ne.s32.totalorder %s97, %s98
      %p110 = scmp.eq.s32.totalorder %s25, 1
      %p111 = por %p109, %p110
      %p113 = scmp.ne.s32.totalorder %s98, %s112
      %p114 = scmp.eq.s32.totalorder %s25, 0
      %p115 = por %p113, %p114
      %s117 = sadd.s32 %s116, 1
      %p120 = scmp.eq.s32.totalorder %s19, 1
      %p121 = scmp.ne.s32.totalorder %s116, %s118
      %p122 = scmp.eq.s32.totalorder %s19, 0
      %p123 = por %p121, %p122
      %p124 = scmp.ne.s32.totalorder %s116, %s118
      %p125 = scmp.eq.s32.totalorder %s24, 1
      %p126 = por %p124, %p125
      %p127 = scmp.ne.s32.totalorder %s118, %s119
      %p128 = scmp.eq.s32.totalorder %s24, 0
      %p129 = por %p127, %p128
      %p130 = scmp.ne.s32.totalorder %s118, %s119
      %p131 = scmp.eq.s32.totalorder %s25, 1
      %p132 = por %p130, %p131
      %p134 = scmp.ne.s32.totalorder %s119, %s133
      %p135 = scmp.eq.s32.totalorder %s25, 0
      %p136 = por %p134, %p135
      %s138 = sadd.s32 %s137, 1
      %p141 = scmp.eq.s32.totalorder %s19, 1
      %p142 = scmp.ne.s32.totalorder %s137, %s139
      %p143 = scmp.eq.s32.totalorder %s19, 0
      %p144 = por %p142, %p143
      %p145 = scmp.ne.s32.totalorder %s137, %s139
      %p146 = scmp.eq.s32.totalorder %s24, 1
      %p147 = por %p145, %p146
      %p148 = scmp.ne.s32.totalorder %s139, %s140
      %p149 = scmp.eq.s32.totalorder %s24, 0
      %p150 = por %p148, %p149
      %p151 = scmp.ne.s32.totalorder %s139, %s140
      %p152 = scmp.eq.s32.totalorder %s25, 1
      %p153 = por %p151, %p152
      %p155 = scmp.ne.s32.totalorder %s140, %s154
      %p156 = scmp.eq.s32.totalorder %s25, 0
      %p157 = por %p155, %p156
      %s159 = sadd.s32 %s158, 1
      %p162 = scmp.eq.s32.totalorder %s19, 1
      %p163 = scmp.ne.s32.totalorder %s158, %s160
      %p164 = scmp.eq.s32.totalorder %s19, 0
      %p165 = por %p163, %p164
      %p166 = scmp.ne.s32.totalorder %s158, %s160
      %p167 = scmp.eq.s32.totalorder %s24, 1
      %p168 = por %p166, %p167
      %p169 = scmp.ne.s32.totalorder %s160, %s161
      %p170 = scmp.eq.s32.totalorder %s24, 0
      %p171 = por %p169, %p170
      %p172 = scmp.ne.s32.totalorder %s160, %s161
      %p173 = scmp.eq.s32.totalorder %s25, 1
      %p174 = por %p172, %p173
      %p176 = scmp.ne.s32.totalorder %s161, %s175
      %p177 = scmp.eq.s32.totalorder %s25, 0
      %p178 = por %p176, %p177
      %s180 = sadd.s32 %s179, 1
      %p183 = scmp.eq.s32.totalorder %s19, 1
      %p184 = scmp.ne.s32.totalorder %s179, %s181
      %p185 = scmp.eq.s32.totalorder %s19, 0
      %p186 = por %p184, %p185
      %p187 = scmp.ne.s32.totalorder %s179, %s181
      %p188 = scmp.eq.s32.totalorder %s24, 1
      %p189 = por %p187, %p188
      %p190 = scmp.ne.s32.totalorder %s181, %s182
      %p191 = scmp.eq.s32.totalorder %s24, 0
      %p192 = por %p190, %p191
      %p193 = scmp.ne.s32.totalorder %s181, %s182
      %p194 = scmp.eq.s32.totalorder %s25, 1
      %p195 = por %p193, %p194
      %p197 = scmp.ne.s32.totalorder %s182, %s196
      %p198 = scmp.eq.s32.totalorder %s25, 0
      %p199 = por %p197, %p198
      %s200 = ssub.s32 %s19, %s26
      %p201 = scmp.eq.s32.totalorder %s200, 0
      %s203 = sadd.s32 %s202, 1
      %s204 = scalar_select %p201, %s202, %s203
      %p207 = pneg %p201
      %p208 = scmp.eq.s32.totalorder %s19, 1
      %p209 = por %p207, %p208
      %p210 = scmp.ne.s32.totalorder %s202, %s205
      %p211 = scmp.eq.s32.totalorder %s19, 0
      %p212 = por %p210, %p211
      %p213 = scmp.ne.s32.totalorder %s202, %s205
      %p214 = scmp.eq.s32.totalorder %s24, 1
      %p215 = por %p213, %p214
      %p216 = scmp.ne.s32.totalorder %s205, %s206
      %p217 = scmp.eq.s32.totalorder %s24, 0
      %p218 = por %p216, %p217
      %p219 = scmp.ne.s32.totalorder %s205, %s206
      %p220 = scmp.eq.s32.totalorder %s25, 1
      %p221 = por %p219, %p220
      %p223 = scmp.ne.s32.totalorder %s206, %s222
      %p224 = scmp.eq.s32.totalorder %s25, 0
      %p225 = por %p223, %p224
      %p226 = scmp.le.s32.totalorder 1, %s19
      %p227 = scmp.lt.s32.totalorder %s19, 3
      %p228 = pnand %p226, %p227
      %p229 = pneg %p228
      // Predicated region
      $region9: #{target_aware_self_attention.1} parent=5 // pred_check
        _
      $region10: #{target_aware_self_attention.1} parent=5 // pred_check_branch
        %231 = sbr.rel (%p228) target = $region12
      $region11: #{target_aware_self_attention.1} parent=5 // pred_region
        %s232 = ssub.s32 %s19, 1
        // Predicated region
        $region13: #{target_aware_self_attention.1} parent=11 // pred_check
          %p233 = pneg %p66
        $region14: #{target_aware_self_attention.1} parent=11 // pred_check_branch
          %235 = sbr.rel (%p233) target = $region16
        $region15: #{target_aware_self_attention.1} parent=11 // pred_region
          _
        $region16: #{target_aware_self_attention.1} parent=11 // pred_fallthru
          _
        // Predicated region
        $region17: #{target_aware_self_attention.1} parent=11 // pred_check
          %p236 = pneg %p87
        $region18: #{target_aware_self_attention.1} parent=11 // pred_check_branch
          %238 = sbr.rel (%p236) target = $region20
        $region19: #{target_aware_self_attention.1} parent=11 // pred_region
          _
        $region20: #{target_aware_self_attention.1} parent=11 // pred_fallthru
          _
        // Predicated region
        $region21: #{target_aware_self_attention.1} parent=11 // pred_check
          %p239 = pneg %p108
        $region22: #{target_aware_self_attention.1} parent=11 // pred_check_branch
          %241 = sbr.rel (%p239) target = $region24
        $region23: #{target_aware_self_attention.1} parent=11 // pred_region
          _
        $region24: #{target_aware_self_attention.1} parent=11 // pred_fallthru
          _
        // Predicated region
        $region25: #{target_aware_self_attention.1} parent=11 // pred_check
          %p242 = pneg %p129
        $region26: #{target_aware_self_attention.1} parent=11 // pred_check_branch
          %244 = sbr.rel (%p242) target = $region28
        $region27: #{target_aware_self_attention.1} parent=11 // pred_region
          _
        $region28: #{target_aware_self_attention.1} parent=11 // pred_fallthru
          _
        // Predicated region
        $region29: #{target_aware_self_attention.1} parent=11 // pred_check
          %p245 = pneg %p150
        $region30: #{target_aware_self_attention.1} parent=11 // pred_check_branch
          %247 = sbr.rel (%p245) target = $region32
        $region31: #{target_aware_self_attention.1} parent=11 // pred_region
          _
        $region32: #{target_aware_self_attention.1} parent=11 // pred_fallthru
          _
        // Predicated region
        $region33: #{target_aware_self_attention.1} parent=11 // pred_check
          %p248 = pneg %p171
        $region34: #{target_aware_self_attention.1} parent=11 // pred_check_branch
          %250 = sbr.rel (%p248) target = $region36
        $region35: #{target_aware_self_attention.1} parent=11 // pred_region
          %s252 = ssub.s32 16, 16
          %253 = vsyncadd [#allocation3], %s252
          %s255 = sshll.u32 [#allocation2], 4
          %s256 = int_to_ptr.vmem [resolvable:$true] %s255
          %258 = dma.hbm_to_vmem [thread:$0]  %s6, 16, %s256, [#allocation3]
        $region36: #{target_aware_self_attention.1} parent=11 // pred_fallthru
          _
        // Predicated region
        $region37: #{target_aware_self_attention.1} parent=11 // pred_check
          %p259 = pneg %p192
        $region38: #{target_aware_self_attention.1} parent=11 // pred_check_branch
          %261 = sbr.rel (%p259) target = $region40
        $region39: #{target_aware_self_attention.1} parent=11 // pred_region
          %s263 = ssub.s32 16, 16
          %264 = vsyncadd [#allocation5], %s263
          %s266 = sshll.u32 %s7, 4
          %s267 = int_to_ptr.vmem [resolvable:$true] %s266
          %269 = dma.vmem_to_smem %s267, 16, [#allocation6], [#allocation5]
        $region40: #{target_aware_self_attention.1} parent=11 // pred_fallthru
          _
      $region12: #{target_aware_self_attention.1} parent=5 // pred_fallthru
        _
      %p270 = scmp.lt.s32.totalorder %s19, 2
      // Predicated region
      $region41: #{target_aware_self_attention.1} parent=5 // pred_check
        %p271 = pneg %p270
      $region42: #{target_aware_self_attention.1} parent=5 // pred_check_branch
        %273 = sbr.rel (%p271) target = $region44
      $region43: #{target_aware_self_attention.1} parent=5 // pred_region
        // Predicated region
        $region45: #{target_aware_self_attention.1} parent=43 // pred_check
          %p274 = pneg %p39
        $region46: #{target_aware_self_attention.1} parent=43 // pred_check_branch
          %276 = sbr.rel (%p274) target = $region48
        $region47: #{target_aware_self_attention.1} parent=43 // pred_region
          %s277 = smul.u32 4, %s19
          %p278 = scmp.lt.s32.totalorder %s277, 7
          %s279 = scalar_select %p278, %s277, 7
          %s280 = smul.addr %s279, 2
          %s281 = smul.addr %s280, 8
          %s282 = scalar_lea.vmem %s0, %s281
          %s283 = smul.u32 4, %s19
        $region48: #{target_aware_self_attention.1} parent=43 // pred_fallthru
          _
      $region44: #{target_aware_self_attention.1} parent=5 // pred_fallthru
        _
      %p284 = scmp.le.s32.totalorder 1, %s19
      %p285 = scmp.lt.s32.totalorder %s19, 3
      %p286 = pnand %p284, %p285
      %p287 = pneg %p286
      // Predicated region
      $region49: #{target_aware_self_attention.1} parent=5 // pred_check
        _
      $region50: #{target_aware_self_attention.1} parent=5 // pred_check_branch
        %289 = sbr.rel (%p286) target = $region52
      $region51: #{target_aware_self_attention.1} parent=5 // pred_region
        %s290 = ssub.s32 %s19, 1
        // Predicated region
        $region53: #{target_aware_self_attention.1} parent=51 // pred_check
          %p291 = pneg %p171
        $region54: #{target_aware_self_attention.1} parent=51 // pred_check_branch
          %293 = sbr.rel (%p291) target = $region56
        $region55: #{target_aware_self_attention.1} parent=51 // pred_region
          %294 = dma.done [#allocation3], 16
        $region56: #{target_aware_self_attention.1} parent=51 // pred_fallthru
          _
        // Predicated region
        $region57: #{target_aware_self_attention.1} parent=51 // pred_check
          %p295 = pneg %p192
        $region58: #{target_aware_self_attention.1} parent=51 // pred_check_branch
          %297 = sbr.rel (%p295) target = $region60
        $region59: #{target_aware_self_attention.1} parent=51 // pred_region
          %298 = dma.done [#allocation5], 16
        $region60: #{target_aware_self_attention.1} parent=51 // pred_fallthru
          _
        %299 = sfence
        %s300 = smul.u32 4, %s24
        %p301 = scmp.lt.s32.totalorder %s300, 7
        %s302 = scalar_select %p301, %s300, 7
        %s303 = smul.addr %s302, 2
        %s304 = smul.addr %s303, 8
        %s305 = scalar_lea.vmem %s0, %s304
        %p306 = pneg %p45
        %p307 = pneg %p42
        %p308 = pneg %p66
        %p309 = pneg %p63
        %p310 = pneg %p87
        %p311 = pneg %p84
        %p312 = pneg %p108
        %p313 = pneg %p105
        %p314 = pneg %p129
        %p315 = pneg %p126
        %p316 = pneg %p150
        %p317 = pneg %p147
        %p318 = pneg %p171
        %p319 = pneg %p168
        %p320 = pneg %p192
        %p321 = pneg %p189
        %p322 = pneg %p218
        %p323 = pneg %p215
        %s324 = sand.u32 %s205, 1
        %s325 = scalar_lea.sflag [#allocation4], %s324
        %s326 = sand.u32 %s205, 1
        %s327 = smul.addr %s326, 32
        %s328 = scalar_lea.vmem [#allocation7], %s327
        %s329 = smul.u32 4, %s24
        %p330 = scmp.lt.s32.totalorder %s329, 7
        %s331 = scalar_select %p330, %s329, 7
        %s332 = smul.addr %s331, 2
        %s333 = smul.addr %s332, 8
        %s334 = scalar_lea.vmem %s0, %s333
        %s335 = smul.u32 4, %s24
        %s336 = smul.u32 4, %s24
        %v338 = vld [vmem:[%s334] sm:$0xff]
        %v339 = vld [vmem:[%s334 + $0x8] sm:$0xff]
        %v340 = vld [vmem:[%s334 + $0x10] sm:$0xff]
        %v341 = vld [vmem:[%s334 + $0x18] sm:$0xff]
        %v342 = vld [vmem:[%s334 + $0x20] sm:$0xff]
        %v343 = vld [vmem:[%s334 + $0x28] sm:$0xff]
        %v344 = vld [vmem:[%s334 + $0x30] sm:$0xff]
        %v345 = vld [vmem:[%s334 + $0x38] sm:$0xff]
        %vm346 = vcmask 261120
        %v347 = vsel %vm346, %v338, 0.0
        %348 = vadd.xlane.f32.xlu0 %v347
        %v349 = vpop.xlane.xlu0 %348
        %v350 = vsel %vm346, %v339, 0.0
        %351 = vadd.xlane.f32.xlu0 %v350
        %v352 = vpop.xlane.xlu0 %351
        %v353 = vsel %vm346, %v340, 0.0
        %354 = vadd.xlane.f32.xlu0 %v353
        %v355 = vpop.xlane.xlu0 %354
        %v356 = vsel %vm346, %v341, 0.0
        %357 = vadd.xlane.f32.xlu0 %v356
        %v358 = vpop.xlane.xlu0 %357
        %v359 = vsel %vm346, %v342, 0.0
        %360 = vadd.xlane.f32.xlu0 %v359
        %v361 = vpop.xlane.xlu0 %360
        %v362 = vsel %vm346, %v343, 0.0
        %363 = vadd.xlane.f32.xlu0 %v362
        %v364 = vpop.xlane.xlu0 %363
        %v365 = vsel %vm346, %v344, 0.0
        %366 = vadd.xlane.f32.xlu0 %v365
        %v367 = vpop.xlane.xlu0 %366
        %v368 = vsel %vm346, %v345, 0.0
        %369 = vadd.xlane.f32.xlu0 %v368
        %v370 = vpop.xlane.xlu0 %369
        %v371 = vrcp.pop 32.0
        %v372 = vmul.f32 %v349, %v371
        %v373 = vmul.f32 %v352, %v371
        %v374 = vmul.f32 %v355, %v371
        %v375 = vmul.f32 %v358, %v371
        %v376 = vmul.f32 %v361, %v371
        %v377 = vmul.f32 %v364, %v371
        %v378 = vmul.f32 %v367, %v371
        %v379 = vmul.f32 %v370, %v371
        %v380 = vsub.f32 %v338, %v372
        %v381 = vsub.f32 %v339, %v373
        %v382 = vsub.f32 %v340, %v374
        %v383 = vsub.f32 %v341, %v375
        %v384 = vsub.f32 %v342, %v376
        %v385 = vsub.f32 %v343, %v377
        %v386 = vsub.f32 %v344, %v378
        %v387 = vsub.f32 %v345, %v379
        %v388 = vmul.f32 %v380, %v380
        %v389 = vmul.f32 %v381, %v381
        %v390 = vmul.f32 %v382, %v382
        %v391 = vmul.f32 %v383, %v383
        %v392 = vmul.f32 %v384, %v384
        %v393 = vmul.f32 %v385, %v385
        %v394 = vmul.f32 %v386, %v386
        %v395 = vmul.f32 %v387, %v387
        %v396 = vsel %vm346, %v388, 0.0
        %397 = vadd.xlane.f32.xlu0 %v396
        %v398 = vpop.xlane.xlu0 %397
        %v399 = vsel %vm346, %v389, 0.0
        %400 = vadd.xlane.f32.xlu0 %v399
        %v401 = vpop.xlane.xlu0 %400
        %v402 = vsel %vm346, %v390, 0.0
        %403 = vadd.xlane.f32.xlu0 %v402
        %v404 = vpop.xlane.xlu0 %403
        %v405 = vsel %vm346, %v391, 0.0
        %406 = vadd.xlane.f32.xlu0 %v405
        %v407 = vpop.xlane.xlu0 %406
        %v408 = vsel %vm346, %v392, 0.0
        %409 = vadd.xlane.f32.xlu0 %v408
        %v410 = vpop.xlane.xlu0 %409
        %v411 = vsel %vm346, %v393, 0.0
        %412 = vadd.xlane.f32.xlu0 %v411
        %v413 = vpop.xlane.xlu0 %412
        %v414 = vsel %vm346, %v394, 0.0
        %415 = vadd.xlane.f32.xlu0 %v414
        %v416 = vpop.xlane.xlu0 %415
        %v417 = vsel %vm346, %v395, 0.0
        %418 = vadd.xlane.f32.xlu0 %v417
        %v419 = vpop.xlane.xlu0 %418
        %v420 = vmul.f32 %v398, %v371
        %v421 = vmul.f32 %v401, %v371
        %v422 = vmul.f32 %v404, %v371
        %v423 = vmul.f32 %v407, %v371
        %v424 = vmul.f32 %v410, %v371
        %v425 = vmul.f32 %v413, %v371
        %v426 = vmul.f32 %v416, %v371
        %v427 = vmul.f32 %v419, %v371
        %v428 = vadd.f32 %v420, 1e-05
        %v429 = vadd.f32 %v421, 1e-05
        %v430 = vadd.f32 %v422, 1e-05
        %v431 = vadd.f32 %v423, 1e-05
        %v432 = vadd.f32 %v424, 1e-05
        %v433 = vadd.f32 %v425, 1e-05
        %v434 = vadd.f32 %v426, 1e-05
        %v435 = vadd.f32 %v427, 1e-05
        %v436 = vrsqrt.pop %v428
        %v437 = vrsqrt.pop %v429
        %v438 = vrsqrt.pop %v430
        %v439 = vrsqrt.pop %v431
        %v440 = vrsqrt.pop %v432
        %v441 = vrsqrt.pop %v433
        %v442 = vrsqrt.pop %v434
        %v443 = vrsqrt.pop %v435
        %v444 = vmul.f32 %v380, %v436
        %v445 = vmul.f32 %v381, %v437
        %v446 = vmul.f32 %v382, %v438
        %v447 = vmul.f32 %v383, %v439
        %v448 = vmul.f32 %v384, %v440
        %v449 = vmul.f32 %v385, %v441
        %v450 = vmul.f32 %v386, %v442
        %v451 = vmul.f32 %v387, %v443
        %v452 = vld [vmem:[%s1] sm:$0x1]
        %v454 = vlaneseq
        %v455 = vshrl.u32 %v454, 7
        %v456 = vsub.s32 0, %v455
        %v457 = vrot.slane %v452, %v456
        %v459 = vmul.f32 %v444, %v457
        %v460 = vmul.f32 %v445, %v457
        %v461 = vmul.f32 %v446, %v457
        %v462 = vmul.f32 %v447, %v457
        %v463 = vmul.f32 %v448, %v457
        %v464 = vmul.f32 %v449, %v457
        %v465 = vmul.f32 %v450, %v457
        %v466 = vmul.f32 %v451, %v457
        %v467 = vld [vmem:[%s2] sm:$0x1]
        %v469 = vlaneseq
        %v470 = vshrl.u32 %v469, 7
        %v471 = vsub.s32 0, %v470
        %v472 = vrot.slane %v467, %v471
        %v474 = vadd.f32 %v459, %v472
        %v475 = vadd.f32 %v460, %v472
        %v476 = vadd.f32 %v461, %v472
        %v477 = vadd.f32 %v462, %v472
        %v478 = vadd.f32 %v463, %v472
        %v479 = vadd.f32 %v464, %v472
        %v480 = vadd.f32 %v465, %v472
        %v481 = vadd.f32 %v466, %v472
        %v482 = vpack.c.bf16 %v475, %v474
        %v483 = vpack.c.bf16 %v477, %v476
        %v484 = vpack.c.bf16 %v479, %v478
        %v485 = vpack.c.bf16 %v481, %v480
        %v486 = vld [vmem:[%s3] sm:$0xf]
        %v487 = vld [vmem:[%s3 + $0x4] sm:$0xf]
        %v488 = vld [vmem:[%s3 + $0x8] sm:$0xf]
        %v489 = vld [vmem:[%s3 + $0xc] sm:$0xf]
        %v490 = vld [vmem:[%s4] sm:$0x1]
        %v492 = vlaneseq
        %v493 = vshrl.u32 %v492, 7
        %v494 = vsub.s32 0, %v493
        %v495 = vrot.slane %v490, %v494
        %v501 = vunpack.c.l.b16 %v486
        %v502 = vunpack.c.l.b16 %v487
        %v503 = vunpack.c.l.b16 %v488
        %v504 = vunpack.c.l.b16 %v489
        %v505 = vpack.c.b16 %v502, %v501
        %v506 = vpack.c.b16 %v504, %v503
        %v510 = vsel %vm346, %v482, 0
        %v513 = vsel %vm346, %v483, 0
        %v516 = vsel %vm346, %v484, 0
        %v519 = vsel %vm346, %v485, 0
        %521 = vmatprep.subr.bf16.mxu0 0
        %522 = vmatpush1.bf16.msra.mxu0 %v505
        %523 = vmatprep.subr.bf16.mxu0 0
        %524 = vmatpush1.bf16.msra.mxu0 %v506
        %525 = vmatprep.subr.bf16.mxu0 0
        %526 = vmatpush1.bf16.msra.mxu0 0
        %527 = vmatprep.subr.bf16.mxu0 0
        %528 = vmatpush1.bf16.msra.mxu0 0
        %529 = vmatprep.subr.bf16.mxu0 0
        %530 = vmatpush1.bf16.msra.mxu0 0
        %531 = vmatprep.subr.bf16.mxu0 0
        %532 = vmatpush1.bf16.msra.mxu0 0
        %533 = vmatprep.subr.bf16.mxu0 0
        %534 = vmatpush1.bf16.msra.mxu0 0
        %535 = vmatprep.subr.bf16.mxu0 0
        %536 = vmatpush1.bf16.msra.mxu0 0
        %537 = vmatprep.subr.bf16.mxu0 0
        %538 = vmatpush1.bf16.msra.mxu0 0
        %539 = vmatprep.subr.bf16.mxu0 0
        %540 = vmatpush1.bf16.msra.mxu0 0
        %541 = vmatprep.subr.bf16.mxu0 0
        %542 = vmatpush1.bf16.msra.mxu0 0
        %543 = vmatprep.subr.bf16.mxu0 0
        %544 = vmatpush1.bf16.msra.mxu0 0
        %545 = vmatprep.subr.bf16.mxu0 0
        %546 = vmatpush1.bf16.msra.mxu0 0
        %547 = vmatprep.subr.bf16.mxu0 0
        %548 = vmatpush1.bf16.msra.mxu0 0
        %549 = vmatprep.subr.bf16.mxu0 0
        %550 = vmatpush1.bf16.msra.mxu0 0
        %551 = vmatprep.subr.bf16.mxu0 0
        %552 = vmatpush1.bf16.msra.mxu0 0
        %553 = vmatprep.mubr.bf16.mxu0 0
        %554 = vmatmul.mubr.bf16.gmra.mrb[0].mxu0 %v510
        %v555 = vpop.f32.mrb[0].mxu0
        %v556 = vadd.f32 %v495, %v555
        %v557 = vpop.f32.mrb[0].mxu0
        %v558 = vpop.f32.mrb[0].mxu0
        %v559 = vadd.f32 %v495, %v558
        %v560 = vpop.f32.mrb[0].mxu0
        %561 = vmatprep.mubr.bf16.mxu0 0
        %562 = vmatmul.mubr.bf16.gmra.mrb[0].mxu0 %v513
        %v563 = vpop.f32.mrb[0].mxu0
        %v564 = vadd.f32 %v495, %v563
        %v565 = vpop.f32.mrb[0].mxu0
        %v566 = vpop.f32.mrb[0].mxu0
        %v567 = vadd.f32 %v495, %v566
        %v568 = vpop.f32.mrb[0].mxu0
        %569 = vmatprep.mubr.bf16.mxu0 0
        %570 = vmatmul.mubr.bf16.gmra.mrb[0].mxu0 %v516
        %v571 = vpop.f32.mrb[0].mxu0
        %v572 = vadd.f32 %v495, %v571
        %v573 = vpop.f32.mrb[0].mxu0
        %v574 = vpop.f32.mrb[0].mxu0
        %v575 = vadd.f32 %v495, %v574
        %v576 = vpop.f32.mrb[0].mxu0
        %577 = vmatprep.mubr.bf16.mxu0 0
        %578 = vmatmul.mubr.bf16.gmra.mrb[0].mxu0 %v519
        %v579 = vpop.f32.mrb[0].mxu0
        %v580 = vadd.f32 %v495, %v579
        %v581 = vpop.f32.mrb[0].mxu0
        %v582 = vpop.f32.mrb[0].mxu0
        %v583 = vadd.f32 %v495, %v582
        %v584 = vpop.f32.mrb[0].mxu0
        %585 = vdwg.mxu0
        %v586 = vmax.f32 %v556, 0.0
        %v587 = vmax.f32 %v559, 0.0
        %v588 = vmax.f32 %v564, 0.0
        %v589 = vmax.f32 %v567, 0.0
        %v590 = vmax.f32 %v572, 0.0
        %v591 = vmax.f32 %v575, 0.0
        %v592 = vmax.f32 %v580, 0.0
        %v593 = vmax.f32 %v583, 0.0
        %v598 = vrot.slane %v587, 7
        %v599 = vrot.slane %v589, 7
        %v600 = vrot.slane %v591, 7
        %v601 = vrot.slane %v593, 7
        %vm610 = vcmask 1040384
        %v611 = vrot.slane %v586, 7
        %v612 = vsel %vm610, %v611, %v598
        %v613 = vrot.slane %v588, 7
        %v614 = vsel %vm610, %v613, %v599
        %v615 = vrot.slane %v590, 7
        %v616 = vsel %vm610, %v615, %v600
        %v617 = vrot.slane %v592, 7
        %v618 = vsel %vm610, %v617, %v601
        %v627 = vsel %vm610, %v598, %v611
        %v628 = vsel %vm610, %v599, %v613
        %v629 = vsel %vm610, %v600, %v615
        %v630 = vsel %vm610, %v601, %v617
        %vm631 = vcmask 1046528
        %v632 = vrot.slane %v586, 1
        %v633 = vrot.slane %v587, 1
        %v634 = vsel %vm631, %v632, %v633
        %v635 = vrot.slane %v588, 1
        %v636 = vrot.slane %v589, 1
        %v637 = vsel %vm631, %v635, %v636
        %v638 = vrot.slane %v590, 1
        %v639 = vrot.slane %v591, 1
        %v640 = vsel %vm631, %v638, %v639
        %v641 = vrot.slane %v592, 1
        %v642 = vrot.slane %v593, 1
        %v643 = vsel %vm631, %v641, %v642
        %v652 = vsel %vm631, %v633, %v632
        %v653 = vsel %vm631, %v636, %v635
        %v654 = vsel %vm631, %v639, %v638
        %v655 = vsel %vm631, %v642, %v641
        %v656 = vrot.slane %v587, 6
        %v657 = vrot.slane %v589, 6
        %v658 = vrot.slane %v591, 6
        %v659 = vrot.slane %v593, 6
        %vm664 = vcmask 1041408
        %v665 = vrot.slane %v586, 6
        %v666 = vsel %vm664, %v665, %v656
        %v667 = vrot.slane %v588, 6
        %v668 = vsel %vm664, %v667, %v657
        %v669 = vrot.slane %v590, 6
        %v670 = vsel %vm664, %v669, %v658
        %v671 = vrot.slane %v592, 6
        %v672 = vsel %vm664, %v671, %v659
        %v677 = vsel %vm664, %v656, %v665
        %v678 = vsel %vm664, %v657, %v667
        %v679 = vsel %vm664, %v658, %v669
        %v680 = vsel %vm664, %v659, %v671
        %vm681 = vcmask 1045504
        %v682 = vrot.slane %v586, 2
        %v683 = vrot.slane %v587, 2
        %v684 = vsel %vm681, %v682, %v683
        %v685 = vrot.slane %v588, 2
        %v686 = vrot.slane %v589, 2
        %v687 = vsel %vm681, %v685, %v686
        %v688 = vrot.slane %v590, 2
        %v689 = vrot.slane %v591, 2
        %v690 = vsel %vm681, %v688, %v689
        %v691 = vrot.slane %v592, 2
        %v692 = vrot.slane %v593, 2
        %v693 = vsel %vm681, %v691, %v692
        %v706 = vsel %vm681, %v683, %v682
        %v707 = vsel %vm681, %v686, %v685
        %v708 = vsel %vm681, %v689, %v688
        %v709 = vsel %vm681, %v692, %v691
        %710 = vrot.lane.b32.xlu0 %v586, 32
        %v711 = vpop.permute.xlu0 %710
        %712 = vrot.lane.b32.xlu0 %v587, 32
        %v713 = vpop.permute.xlu0 %712
        %714 = vrot.lane.b32.xlu0 %v588, 32
        %v715 = vpop.permute.xlu0 %714
        %716 = vrot.lane.b32.xlu0 %v589, 32
        %v717 = vpop.permute.xlu0 %716
        %718 = vrot.lane.b32.xlu0 %v590, 32
        %v719 = vpop.permute.xlu0 %718
        %720 = vrot.lane.b32.xlu0 %v591, 32
        %v721 = vpop.permute.xlu0 %720
        %722 = vrot.lane.b32.xlu0 %v592, 32
        %v723 = vpop.permute.xlu0 %722
        %724 = vrot.lane.b32.xlu0 %v593, 32
        %v725 = vpop.permute.xlu0 %724
        %738 = vrot.lane.b32.xlu0 %v634, 64
        %v739 = vpop.permute.xlu0 %738
        %740 = vrot.lane.b32.xlu0 %v652, 64
        %v741 = vpop.permute.xlu0 %740
        %742 = vrot.lane.b32.xlu0 %v637, 64
        %v743 = vpop.permute.xlu0 %742
        %744 = vrot.lane.b32.xlu0 %v653, 64
        %v745 = vpop.permute.xlu0 %744
        %746 = vrot.lane.b32.xlu0 %v640, 64
        %v747 = vpop.permute.xlu0 %746
        %748 = vrot.lane.b32.xlu0 %v654, 64
        %v749 = vpop.permute.xlu0 %748
        %750 = vrot.lane.b32.xlu0 %v643, 64
        %v751 = vpop.permute.xlu0 %750
        %752 = vrot.lane.b32.xlu0 %v655, 64
        %v753 = vpop.permute.xlu0 %752
        %766 = vrot.lane.b32.xlu0 %v677, 64
        %v767 = vpop.permute.xlu0 %766
        %768 = vrot.lane.b32.xlu0 %v666, 64
        %v769 = vpop.permute.xlu0 %768
        %770 = vrot.lane.b32.xlu0 %v678, 64
        %v771 = vpop.permute.xlu0 %770
        %772 = vrot.lane.b32.xlu0 %v668, 64
        %v773 = vpop.permute.xlu0 %772
        %774 = vrot.lane.b32.xlu0 %v679, 64
        %v775 = vpop.permute.xlu0 %774
        %776 = vrot.lane.b32.xlu0 %v670, 64
        %v777 = vpop.permute.xlu0 %776
        %778 = vrot.lane.b32.xlu0 %v680, 64
        %v779 = vpop.permute.xlu0 %778
        %780 = vrot.lane.b32.xlu0 %v672, 64
        %v781 = vpop.permute.xlu0 %780
        %790 = vrot.lane.b32.xlu0 %v586, 96
        %v791 = vpop.permute.xlu0 %790
        %792 = vrot.lane.b32.xlu0 %v587, 96
        %v793 = vpop.permute.xlu0 %792
        %794 = vrot.lane.b32.xlu0 %v588, 96
        %v795 = vpop.permute.xlu0 %794
        %796 = vrot.lane.b32.xlu0 %v589, 96
        %v797 = vpop.permute.xlu0 %796
        %798 = vrot.lane.b32.xlu0 %v590, 96
        %v799 = vpop.permute.xlu0 %798
        %800 = vrot.lane.b32.xlu0 %v591, 96
        %v801 = vpop.permute.xlu0 %800
        %802 = vrot.lane.b32.xlu0 %v592, 96
        %v803 = vpop.permute.xlu0 %802
        %804 = vrot.lane.b32.xlu0 %v593, 96
        %v805 = vpop.permute.xlu0 %804
        %v814 = vsel %vm346, %v586, %v627
        %v815 = vsel %vm346, %v587, %v612
        %v816 = vsel %vm346, %v588, %v628
        %v817 = vsel %vm346, %v589, %v614
        %v818 = vsel %vm346, %v590, %v629
        %v819 = vsel %vm346, %v591, %v616
        %v820 = vsel %vm346, %v592, %v630
        %v821 = vsel %vm346, %v593, %v618
        %vm822 = vcmask 523264
        %v823 = vsel %vm822, %v814, %v711
        %v824 = vsel %vm822, %v815, %v713
        %v825 = vsel %vm822, %v816, %v715
        %v826 = vsel %vm822, %v817, %v717
        %v827 = vsel %vm822, %v818, %v719
        %v828 = vsel %vm822, %v819, %v721
        %v829 = vsel %vm822, %v820, %v723
        %v830 = vsel %vm822, %v821, %v725
        %vm831 = vcmask 785408
        %v832 = vsel %vm831, %v823, %v739
        %v833 = vsel %vm831, %v824, %v741
        %v834 = vsel %vm831, %v825, %v743
        %v835 = vsel %vm831, %v826, %v745
        %v836 = vsel %vm831, %v827, %v747
        %v837 = vsel %vm831, %v828, %v749
        %v838 = vsel %vm831, %v829, %v751
        %v839 = vsel %vm831, %v830, %v753
        %v840 = vsel %vm346, %v767, %v791
        %v841 = vsel %vm346, %v769, %v793
        %v842 = vsel %vm346, %v771, %v795
        %v843 = vsel %vm346, %v773, %v797
        %v844 = vsel %vm346, %v775, %v799
        %v845 = vsel %vm346, %v777, %v801
        %v846 = vsel %vm346, %v779, %v803
        %v847 = vsel %vm346, %v781, %v805
        %v848 = vsel %vm822, %v840, %v684
        %v849 = vsel %vm822, %v841, %v706
        %v850 = vsel %vm822, %v842, %v687
        %v851 = vsel %vm822, %v843, %v707
        %v852 = vsel %vm822, %v844, %v690
        %v853 = vsel %vm822, %v845, %v708
        %v854 = vsel %vm822, %v846, %v693
        %v855 = vsel %vm822, %v847, %v709
        %v856 = vpack.c.bf16 %v833, %v832
        %v857 = vpack.c.bf16 %v849, %v848
        %v858 = vpack.c.bf16 %v835, %v834
        %v859 = vpack.c.bf16 %v851, %v850
        %v860 = vpack.c.bf16 %v837, %v836
        %v861 = vpack.c.bf16 %v853, %v852
        %v862 = vpack.c.bf16 %v839, %v838
        %v863 = vpack.c.bf16 %v855, %v854
        %v864 = vld [vmem:[%s5] sm:$0xf]
        %v865 = vld [vmem:[%s5 + $0x4] sm:$0xf]
        %v866 = vld [vmem:[%s5 + $0x8] sm:$0xf]
        %v867 = vld [vmem:[%s5 + $0xc] sm:$0xf]
        %v868 = vld [vmem:[%s5 + $0x10] sm:$0xf]
        %v869 = vld [vmem:[%s5 + $0x14] sm:$0xf]
        %v870 = vld [vmem:[%s5 + $0x18] sm:$0xf]
        %v871 = vld [vmem:[%s5 + $0x1c] sm:$0xf]
        %v872 = vld [vmem:[%s5 + $0x20] sm:$0xf]
        %v873 = vld [vmem:[%s5 + $0x24] sm:$0xf]
        %v874 = vld [vmem:[%s5 + $0x28] sm:$0xf]
        %v875 = vld [vmem:[%s5 + $0x2c] sm:$0xf]
        %v876 = vld [vmem:[%s5 + $0x30] sm:$0xf]
        %v877 = vld [vmem:[%s5 + $0x34] sm:$0xf]
        %v878 = vld [vmem:[%s5 + $0x38] sm:$0xf]
        %v879 = vld [vmem:[%s5 + $0x3c] sm:$0xf]
        %v880 = vld [vmem:[%s5 + $0x40] sm:$0xf]
        %v881 = vld [vmem:[%s5 + $0x44] sm:$0xf]
        %v882 = vld [vmem:[%s5 + $0x48] sm:$0xf]
        %v883 = vld [vmem:[%s5 + $0x4c] sm:$0xf]
        %v884 = vld [vmem:[%s5 + $0x50] sm:$0xf]
        %v885 = vld [vmem:[%s5 + $0x54] sm:$0xf]
        %v886 = vld [vmem:[%s5 + $0x58] sm:$0xf]
        %v887 = vld [vmem:[%s5 + $0x5c] sm:$0xf]
        %v888 = vld [vmem:[%s5 + $0x60] sm:$0xf]
        %v889 = vld [vmem:[%s5 + $0x64] sm:$0xf]
        %v890 = vld [vmem:[%s5 + $0x68] sm:$0xf]
        %v891 = vld [vmem:[%s5 + $0x6c] sm:$0xf]
        %v892 = vld [vmem:[#allocation2] sm:$0x1]
        %v894 = vlaneseq
        %v895 = vshrl.u32 %v894, 7
        %v896 = vsub.s32 0, %v895
        %v897 = vrot.slane %v892, %v896
        %v927 = vunpack.c.l.b16 %v864
        %v928 = vunpack.c.l.b16 %v865
        %v929 = vunpack.c.l.b16 %v866
        %v930 = vunpack.c.l.b16 %v867
        %v931 = vunpack.c.l.b16 %v868
        %v932 = vunpack.c.l.b16 %v869
        %v933 = vunpack.c.l.b16 %v870
        %v934 = vunpack.c.l.b16 %v871
        %v935 = vunpack.c.l.b16 %v872
        %v936 = vunpack.c.l.b16 %v873
        %v937 = vunpack.c.l.b16 %v874
        %v938 = vunpack.c.l.b16 %v875
        %v939 = vunpack.c.l.b16 %v876
        %v940 = vunpack.c.l.b16 %v877
        %v941 = vunpack.c.l.b16 %v878
        %v942 = vunpack.c.l.b16 %v879
        %v943 = vunpack.c.l.b16 %v880
        %v944 = vunpack.c.l.b16 %v881
        %v945 = vunpack.c.l.b16 %v882
        %v946 = vunpack.c.l.b16 %v883
        %v947 = vunpack.c.l.b16 %v884
        %v948 = vunpack.c.l.b16 %v885
        %v949 = vunpack.c.l.b16 %v886
        %v950 = vunpack.c.l.b16 %v887
        %v951 = vunpack.c.l.b16 %v888
        %v952 = vunpack.c.l.b16 %v889
        %v953 = vunpack.c.l.b16 %v890
        %v954 = vunpack.c.l.b16 %v891
        %v955 = vpack.c.b16 %v928, %v927
        %v956 = vpack.c.b16 %v930, %v929
        %v957 = vpack.c.b16 %v932, %v931
        %v958 = vpack.c.b16 %v934, %v933
        %v959 = vpack.c.b16 %v936, %v935
        %v960 = vpack.c.b16 %v938, %v937
        %v961 = vpack.c.b16 %v940, %v939
        %v962 = vpack.c.b16 %v942, %v941
        %v963 = vpack.c.b16 %v944, %v943
        %v964 = vpack.c.b16 %v946, %v945
        %v965 = vpack.c.b16 %v948, %v947
        %v966 = vpack.c.b16 %v950, %v949
        %v967 = vpack.c.b16 %v952, %v951
        %v968 = vpack.c.b16 %v954, %v953
        %v984 = vsel %vm831, %v857, 0
        %v987 = vsel %vm831, %v859, 0
        %v990 = vsel %vm831, %v861, 0
        %v993 = vsel %vm831, %v863, 0
        %995 = vmatprep.subr.bf16.mxu0 0
        %996 = vmatpush1.bf16.msra.mxu0 %v955
        %997 = vmatprep.subr.bf16.mxu0 0
        %998 = vmatpush1.bf16.msra.mxu0 %v956
        %999 = vmatprep.subr.bf16.mxu0 0
        %1000 = vmatpush1.bf16.msra.mxu0 %v957
        %1001 = vmatprep.subr.bf16.mxu0 0
        %1002 = vmatpush1.bf16.msra.mxu0 %v958
        %1003 = vmatprep.subr.bf16.mxu0 0
        %1004 = vmatpush1.bf16.msra.mxu0 %v959
        %1005 = vmatprep.subr.bf16.mxu0 0
        %1006 = vmatpush1.bf16.msra.mxu0 %v960
        %1007 = vmatprep.subr.bf16.mxu0 0
        %1008 = vmatpush1.bf16.msra.mxu0 %v961
        %1009 = vmatprep.subr.bf16.mxu0 0
        %1010 = vmatpush1.bf16.msra.mxu0 %v962
        %1011 = vmatprep.subr.bf16.mxu0 0
        %1012 = vmatpush1.bf16.msra.mxu0 %v963
        %1013 = vmatprep.subr.bf16.mxu0 0
        %1014 = vmatpush1.bf16.msra.mxu0 %v964
        %1015 = vmatprep.subr.bf16.mxu0 0
        %1016 = vmatpush1.bf16.msra.mxu0 %v965
        %1017 = vmatprep.subr.bf16.mxu0 0
        %1018 = vmatpush1.bf16.msra.mxu0 %v966
        %1019 = vmatprep.subr.bf16.mxu0 0
        %1020 = vmatpush1.bf16.msra.mxu0 %v967
        %1021 = vmatprep.subr.bf16.mxu0 0
        %1022 = vmatpush1.bf16.msra.mxu0 %v968
        %1023 = vmatprep.subr.bf16.mxu0 0
        %1024 = vmatpush1.bf16.msra.mxu0 0
        %1025 = vmatprep.subr.bf16.mxu0 0
        %1026 = vmatpush1.bf16.msra.mxu0 0
        %1027 = vmatprep.mubr.bf16.mxu0 %v984
        %1028 = vmatmul.mubr.bf16.gmra.mrb[0].mxu0 %v856
        %v1029 = vpop.f32.mrb[0].mxu0
        %v1030 = vadd.f32 %v897, %v1029
        %v1031 = vpop.f32.mrb[0].mxu0
        %v1032 = vpop.f32.mrb[0].mxu0
        %v1033 = vadd.f32 %v897, %v1032
        %v1034 = vpop.f32.mrb[0].mxu0
        %1035 = vmatprep.mubr.bf16.mxu0 %v987
        %1036 = vmatmul.mubr.bf16.gmra.mrb[0].mxu0 %v858
        %v1037 = vpop.f32.mrb[0].mxu0
        %v1038 = vadd.f32 %v897, %v1037
        %v1039 = vpop.f32.mrb[0].mxu0
        %v1040 = vpop.f32.mrb[0].mxu0
        %v1041 = vadd.f32 %v897, %v1040
        %v1042 = vpop.f32.mrb[0].mxu0
        %1043 = vmatprep.mubr.bf16.mxu0 %v990
        %1044 = vmatmul.mubr.bf16.gmra.mrb[0].mxu0 %v860
        %v1045 = vpop.f32.mrb[0].mxu0
        %v1046 = vadd.f32 %v897, %v1045
        %v1047 = vpop.f32.mrb[0].mxu0
        %v1048 = vpop.f32.mrb[0].mxu0
        %v1049 = vadd.f32 %v897, %v1048
        %v1050 = vpop.f32.mrb[0].mxu0
        %1051 = vmatprep.mubr.bf16.mxu0 %v993
        %1052 = vmatmul.mubr.bf16.gmra.mrb[0].mxu0 %v862
        %v1053 = vpop.f32.mrb[0].mxu0
        %v1054 = vadd.f32 %v897, %v1053
        %v1055 = vpop.f32.mrb[0].mxu0
        %v1056 = vpop.f32.mrb[0].mxu0
        %v1057 = vadd.f32 %v897, %v1056
        %v1058 = vpop.f32.mrb[0].mxu0
        %1059 = vdwg.mxu0
        %v1060 = vmax.f32 %v1030, 0.0
        %v1061 = vmax.f32 %v1033, 0.0
        %v1062 = vmax.f32 %v1038, 0.0
        %v1063 = vmax.f32 %v1041, 0.0
        %v1064 = vmax.f32 %v1046, 0.0
        %v1065 = vmax.f32 %v1049, 0.0
        %v1066 = vmax.f32 %v1054, 0.0
        %v1067 = vmax.f32 %v1057, 0.0
        %s1068 = sld [smem:[#allocation6]]
        %s1069 = sld [smem:[#allocation6 + $0x1]]
        %s1070 = sld [smem:[#allocation6 + $0x2]]
        %s1071 = sld [smem:[#allocation6 + $0x3]]
        %v1072 = vstv %s1068
        %v1073 = vmul.f32 %v1072, %v1060
        %v1074 = vmul.f32 %v1072, %v1061
        %v1075 = vmul.f32 %v1072, %v1062
        %v1076 = vmul.f32 %v1072, %v1063
        %v1077 = vmul.f32 %v1072, %v1064
        %v1078 = vmul.f32 %v1072, %v1065
        %v1079 = vmul.f32 %v1072, %v1066
        %v1080 = vmul.f32 %v1072, %v1067
        %v1081 = vstv %s1069
        %v1082 = vmul.f32 %v1081, %v1060
        %v1083 = vmul.f32 %v1081, %v1061
        %v1084 = vmul.f32 %v1081, %v1062
        %v1085 = vmul.f32 %v1081, %v1063
        %v1086 = vmul.f32 %v1081, %v1064
        %v1087 = vmul.f32 %v1081, %v1065
        %v1088 = vmul.f32 %v1081, %v1066
        %v1089 = vmul.f32 %v1081, %v1067
        %v1090 = vstv %s1070
        %v1091 = vmul.f32 %v1090, %v1060
        %v1092 = vmul.f32 %v1090, %v1061
        %v1093 = vmul.f32 %v1090, %v1062
        %v1094 = vmul.f32 %v1090, %v1063
        %v1095 = vmul.f32 %v1090, %v1064
        %v1096 = vmul.f32 %v1090, %v1065
        %v1097 = vmul.f32 %v1090, %v1066
        %v1098 = vmul.f32 %v1090, %v1067
        %1107 = vrot.lane.b32.xlu0 %v1082, 120
        %v1108 = vpop.permute.xlu0 %1107
        %1109 = vrot.lane.b32.xlu0 %v1083, 120
        %v1110 = vpop.permute.xlu0 %1109
        %1111 = vrot.lane.b32.xlu0 %v1084, 120
        %v1112 = vpop.permute.xlu0 %1111
        %1113 = vrot.lane.b32.xlu0 %v1085, 120
        %v1114 = vpop.permute.xlu0 %1113
        %1115 = vrot.lane.b32.xlu0 %v1086, 120
        %v1116 = vpop.permute.xlu0 %1115
        %1117 = vrot.lane.b32.xlu0 %v1087, 120
        %v1118 = vpop.permute.xlu0 %1117
        %1119 = vrot.lane.b32.xlu0 %v1088, 120
        %v1120 = vpop.permute.xlu0 %1119
        %1121 = vrot.lane.b32.xlu0 %v1089, 120
        %v1122 = vpop.permute.xlu0 %1121
        %1139 = vrot.lane.b32.xlu0 %v1091, 112
        %v1140 = vpop.permute.xlu0 %1139
        %1141 = vrot.lane.b32.xlu0 %v1092, 112
        %v1142 = vpop.permute.xlu0 %1141
        %1143 = vrot.lane.b32.xlu0 %v1093, 112
        %v1144 = vpop.permute.xlu0 %1143
        %1145 = vrot.lane.b32.xlu0 %v1094, 112
        %v1146 = vpop.permute.xlu0 %1145
        %1147 = vrot.lane.b32.xlu0 %v1095, 112
        %v1148 = vpop.permute.xlu0 %1147
        %1149 = vrot.lane.b32.xlu0 %v1096, 112
        %v1150 = vpop.permute.xlu0 %1149
        %1151 = vrot.lane.b32.xlu0 %v1097, 112
        %v1152 = vpop.permute.xlu0 %1151
        %1153 = vrot.lane.b32.xlu0 %v1098, 112
        %v1154 = vpop.permute.xlu0 %1153
        %v1163 = vpack.c.bf16 %v1074, %v1073
        %v1164 = vpack.c.bf16 %v1110, %v1108
        %v1165 = vpack.c.bf16 %v1142, %v1140
        %v1166 = vpack.c.bf16 %v1076, %v1075
        %v1167 = vpack.c.bf16 %v1114, %v1112
        %v1168 = vpack.c.bf16 %v1146, %v1144
        %v1169 = vpack.c.bf16 %v1078, %v1077
        %v1170 = vpack.c.bf16 %v1118, %v1116
        %v1171 = vpack.c.bf16 %v1150, %v1148
        %v1172 = vpack.c.bf16 %v1080, %v1079
        %v1173 = vpack.c.bf16 %v1122, %v1120
        %v1174 = vpack.c.bf16 %v1154, %v1152
        %1175 = vrot.lane.b32.xlu0 %v586, 64
        %v1176 = vpop.permute.xlu0 %1175
        %1177 = vrot.lane.b32.xlu0 %v587, 64
        %v1178 = vpop.permute.xlu0 %1177
        %1179 = vrot.lane.b32.xlu0 %v588, 64
        %v1180 = vpop.permute.xlu0 %1179
        %1181 = vrot.lane.b32.xlu0 %v589, 64
        %v1182 = vpop.permute.xlu0 %1181
        %1183 = vrot.lane.b32.xlu0 %v590, 64
        %v1184 = vpop.permute.xlu0 %1183
        %1185 = vrot.lane.b32.xlu0 %v591, 64
        %v1186 = vpop.permute.xlu0 %1185
        %1187 = vrot.lane.b32.xlu0 %v592, 64
        %v1188 = vpop.permute.xlu0 %1187
        %1189 = vrot.lane.b32.xlu0 %v593, 64
        %v1190 = vpop.permute.xlu0 %1189
        %v1199 = vpack.c.bf16 %v587, %v586
        %v1200 = vpack.c.bf16 %v793, %v791
        %v1201 = vpack.c.bf16 %v1178, %v1176
        %v1202 = vpack.c.bf16 %v589, %v588
        %v1203 = vpack.c.bf16 %v797, %v795
        %v1204 = vpack.c.bf16 %v1182, %v1180
        %v1205 = vpack.c.bf16 %v591, %v590
        %v1206 = vpack.c.bf16 %v801, %v799
        %v1207 = vpack.c.bf16 %v1186, %v1184
        %v1208 = vpack.c.bf16 %v593, %v592
        %v1209 = vpack.c.bf16 %v805, %v803
        %v1210 = vpack.c.bf16 %v1190, %v1188
        %v1211 = vstv %s1071
        %1212 = vxpose.xlu0.c.b16.start [1/8] %v1163, 128
        %1213 = vxpose.xlu0.c.b16.cont [2/8] %v1164, 128
        %1214 = vxpose.xlu0.c.b16.cont [3/8] %v1165, 128
        %1215 = vxpose.xlu0.c.b16.cont [4/8] 0, 128
        %1216 = vxpose.xlu0.c.b16.cont [5/8] 0, 128
        %1217 = vxpose.xlu0.c.b16.cont [6/8] 0, 128
        %1218 = vxpose.xlu0.c.b16.cont [7/8] 0, 128
        %1219 = vxpose.xlu0.c.b16.end [8/8] 0, 128
        %v1220 = vpop.trf.xlu0
        %v1221 = vpop.trf.xlu0
        %v1222 = vpop.trf.xlu0
        %v1223 = vpop.trf.xlu0
        %v1224 = vpop.trf.xlu0
        %v1225 = vpop.trf.xlu0
        %v1226 = vpop.trf.xlu0
        %v1227 = vpop.trf.xlu0
        %vm1228 = vcmask 392192
        %v1230 = vsel %vm1228, %v1220, 0
        %1232 = vmatprep.subr.bf16.mxu0 0
        %1233 = vmatpush1.bf16.msra.mxu0 %v1199
        %1234 = vmatprep.subr.bf16.mxu0 0
        %1235 = vmatpush1.bf16.msra.mxu0 %v1200
        %1236 = vmatprep.subr.bf16.mxu0 0
        %1237 = vmatpush1.bf16.msra.mxu0 %v1201
        %1238 = vmatprep.subr.bf16.mxu0 0
        %1239 = vmatpush1.bf16.msra.mxu0 0
        %1240 = vmatprep.subr.bf16.mxu0 0
        %1241 = vmatpush1.bf16.msra.mxu0 0
        %1242 = vmatprep.subr.bf16.mxu0 0
        %1243 = vmatpush1.bf16.msra.mxu0 0
        %1244 = vmatprep.subr.bf16.mxu0 0
        %1245 = vmatpush1.bf16.msra.mxu0 0
        %1246 = vmatprep.subr.bf16.mxu0 0
        %1247 = vmatpush1.bf16.msra.mxu0 0
        %1248 = vmatprep.subr.bf16.mxu0 0
        %1249 = vmatpush1.bf16.msra.mxu0 0
        %1250 = vmatprep.subr.bf16.mxu0 0
        %1251 = vmatpush1.bf16.msra.mxu0 0
        %1252 = vmatprep.subr.bf16.mxu0 0
        %1253 = vmatpush1.bf16.msra.mxu0 0
        %1254 = vmatprep.subr.bf16.mxu0 0
        %1255 = vmatpush1.bf16.msra.mxu0 0
        %1256 = vmatprep.subr.bf16.mxu0 0
        %1257 = vmatpush1.bf16.msra.mxu0 0
        %1258 = vmatprep.subr.bf16.mxu0 0
        %1259 = vmatpush1.bf16.msra.mxu0 0
        %1260 = vmatprep.subr.bf16.mxu0 0
        %1261 = vmatpush1.bf16.msra.mxu0 0
        %1262 = vmatprep.subr.bf16.mxu0 0
        %1263 = vmatpush1.bf16.msra.mxu0 0
        %1264 = vmatprep.mubr.bf16.mxu0 0
        %1265 = vmatmul.mubr.bf16.gmra.mrb[0].mxu0 %v1230
        %v1266 = vpop.f32.mrb[0].mxu0
        %v1267 = vadd.f32 %v1211, %v1266
        %v1268 = vpop.f32.mrb[0].mxu0
        %v1269 = vpop.f32.mrb[0].mxu0
        %v1270 = vpop.f32.mrb[0].mxu0
        %1271 = vdwg.mxu0
        %1272 = vst.msk [vmem:[%s328] sm:$0xff] %vm346, %v1267
        %1273 = vxpose.xlu0.c.b16.start [1/8] %v1166, 128
        %1274 = vxpose.xlu0.c.b16.cont [2/8] %v1167, 128
        %1275 = vxpose.xlu0.c.b16.cont [3/8] %v1168, 128
        %1276 = vxpose.xlu0.c.b16.cont [4/8] 0, 128
        %1277 = vxpose.xlu0.c.b16.cont [5/8] 0, 128
        %1278 = vxpose.xlu0.c.b16.cont [6/8] 0, 128
        %1279 = vxpose.xlu0.c.b16.cont [7/8] 0, 128
        %1280 = vxpose.xlu0.c.b16.end [8/8] 0, 128
        %v1281 = vpop.trf.xlu0
        %v1282 = vpop.trf.xlu0
        %v1283 = vpop.trf.xlu0
        %v1284 = vpop.trf.xlu0
        %v1285 = vpop.trf.xlu0
        %v1286 = vpop.trf.xlu0
        %v1287 = vpop.trf.xlu0
        %v1288 = vpop.trf.xlu0
        %v1290 = vsel %vm1228, %v1281, 0
        %1292 = vmatprep.subr.bf16.mxu0 0
        %1293 = vmatpush1.bf16.msra.mxu0 %v1202
        %1294 = vmatprep.subr.bf16.mxu0 0
        %1295 = vmatpush1.bf16.msra.mxu0 %v1203
        %1296 = vmatprep.subr.bf16.mxu0 0
        %1297 = vmatpush1.bf16.msra.mxu0 %v1204
        %1298 = vmatprep.subr.bf16.mxu0 0
        %1299 = vmatpush1.bf16.msra.mxu0 0
        %1300 = vmatprep.subr.bf16.mxu0 0
        %1301 = vmatpush1.bf16.msra.mxu0 0
        %1302 = vmatprep.subr.bf16.mxu0 0
        %1303 = vmatpush1.bf16.msra.mxu0 0
        %1304 = vmatprep.subr.bf16.mxu0 0
        %1305 = vmatpush1.bf16.msra.mxu0 0
        %1306 = vmatprep.subr.bf16.mxu0 0
        %1307 = vmatpush1.bf16.msra.mxu0 0
        %1308 = vmatprep.subr.bf16.mxu0 0
        %1309 = vmatpush1.bf16.msra.mxu0 0
        %1310 = vmatprep.subr.bf16.mxu0 0
        %1311 = vmatpush1.bf16.msra.mxu0 0
        %1312 = vmatprep.subr.bf16.mxu0 0
        %1313 = vmatpush1.bf16.msra.mxu0 0
        %1314 = vmatprep.subr.bf16.mxu0 0
        %1315 = vmatpush1.bf16.msra.mxu0 0
        %1316 = vmatprep.subr.bf16.mxu0 0
        %1317 = vmatpush1.bf16.msra.mxu0 0
        %1318 = vmatprep.subr.bf16.mxu0 0
        %1319 = vmatpush1.bf16.msra.mxu0 0
        %1320 = vmatprep.subr.bf16.mxu0 0
        %1321 = vmatpush1.bf16.msra.mxu0 0
        %1322 = vmatprep.subr.bf16.mxu0 0
        %1323 = vmatpush1.bf16.msra.mxu0 0
        %1324 = vmatprep.mubr.bf16.mxu0 0
        %1325 = vmatmul.mubr.bf16.gmra.mrb[0].mxu0 %v1290
        %v1326 = vpop.f32.mrb[0].mxu0
        %v1327 = vadd.f32 %v1211, %v1326
        %v1328 = vpop.f32.mrb[0].mxu0
        %v1329 = vpop.f32.mrb[0].mxu0
        %v1330 = vpop.f32.mrb[0].mxu0
        %1331 = vdwg.mxu0
        %s1332 = scalar_lea.vmem %s328, 8 [#allocation7]
        %1333 = vst.msk [vmem:[%s1332] sm:$0xff] %vm346, %v1327
        %1334 = vxpose.xlu0.c.b16.start [1/8] %v1169, 128
        %1335 = vxpose.xlu0.c.b16.cont [2/8] %v1170, 128
        %1336 = vxpose.xlu0.c.b16.cont [3/8] %v1171, 128
        %1337 = vxpose.xlu0.c.b16.cont [4/8] 0, 128
        %1338 = vxpose.xlu0.c.b16.cont [5/8] 0, 128
        %1339 = vxpose.xlu0.c.b16.cont [6/8] 0, 128
        %1340 = vxpose.xlu0.c.b16.cont [7/8] 0, 128
        %1341 = vxpose.xlu0.c.b16.end [8/8] 0, 128
        %v1342 = vpop.trf.xlu0
        %v1343 = vpop.trf.xlu0
        %v1344 = vpop.trf.xlu0
        %v1345 = vpop.trf.xlu0
        %v1346 = vpop.trf.xlu0
        %v1347 = vpop.trf.xlu0
        %v1348 = vpop.trf.xlu0
        %v1349 = vpop.trf.xlu0
        %v1351 = vsel %vm1228, %v1342, 0
        %1353 = vmatprep.subr.bf16.mxu0 0
        %1354 = vmatpush1.bf16.msra.mxu0 %v1205
        %1355 = vmatprep.subr.bf16.mxu0 0
        %1356 = vmatpush1.bf16.msra.mxu0 %v1206
        %1357 = vmatprep.subr.bf16.mxu0 0
        %1358 = vmatpush1.bf16.msra.mxu0 %v1207
        %1359 = vmatprep.subr.bf16.mxu0 0
        %1360 = vmatpush1.bf16.msra.mxu0 0
        %1361 = vmatprep.subr.bf16.mxu0 0
        %1362 = vmatpush1.bf16.msra.mxu0 0
        %1363 = vmatprep.subr.bf16.mxu0 0
        %1364 = vmatpush1.bf16.msra.mxu0 0
        %1365 = vmatprep.subr.bf16.mxu0 0
        %1366 = vmatpush1.bf16.msra.mxu0 0
        %1367 = vmatprep.subr.bf16.mxu0 0
        %1368 = vmatpush1.bf16.msra.mxu0 0
        %1369 = vmatprep.subr.bf16.mxu0 0
        %1370 = vmatpush1.bf16.msra.mxu0 0
        %1371 = vmatprep.subr.bf16.mxu0 0
        %1372 = vmatpush1.bf16.msra.mxu0 0
        %1373 = vmatprep.subr.bf16.mxu0 0
        %1374 = vmatpush1.bf16.msra.mxu0 0
        %1375 = vmatprep.subr.bf16.mxu0 0
        %1376 = vmatpush1.bf16.msra.mxu0 0
        %1377 = vmatprep.subr.bf16.mxu0 0
        %1378 = vmatpush1.bf16.msra.mxu0 0
        %1379 = vmatprep.subr.bf16.mxu0 0
        %1380 = vmatpush1.bf16.msra.mxu0 0
        %1381 = vmatprep.subr.bf16.mxu0 0
        %1382 = vmatpush1.bf16.msra.mxu0 0
        %1383 = vmatprep.subr.bf16.mxu0 0
        %1384 = vmatpush1.bf16.msra.mxu0 0
        %1385 = vmatprep.mubr.bf16.mxu0 0
        %1386 = vmatmul.mubr.bf16.gmra.mrb[0].mxu0 %v1351
        %v1387 = vpop.f32.mrb[0].mxu0
        %v1388 = vadd.f32 %v1211, %v1387
        %v1389 = vpop.f32.mrb[0].mxu0
        %v1390 = vpop.f32.mrb[0].mxu0
        %v1391 = vpop.f32.mrb[0].mxu0
        %1392 = vdwg.mxu0
        %s1393 = scalar_lea.vmem %s328, 16 [#allocation7]
        %1394 = vst.msk [vmem:[%s1393] sm:$0xff] %vm346, %v1388
        %1395 = vxpose.xlu0.c.b16.start [1/8] %v1172, 128
        %1396 = vxpose.xlu0.c.b16.cont [2/8] %v1173, 128
        %1397 = vxpose.xlu0.c.b16.cont [3/8] %v1174, 128
        %1398 = vxpose.xlu0.c.b16.cont [4/8] 0, 128
        %1399 = vxpose.xlu0.c.b16.cont [5/8] 0, 128
        %1400 = vxpose.xlu0.c.b16.cont [6/8] 0, 128
        %1401 = vxpose.xlu0.c.b16.cont [7/8] 0, 128
        %1402 = vxpose.xlu0.c.b16.end [8/8] 0, 128
        %v1403 = vpop.trf.xlu0
        %v1404 = vpop.trf.xlu0
        %v1405 = vpop.trf.xlu0
        %v1406 = vpop.trf.xlu0
        %v1407 = vpop.trf.xlu0
        %v1408 = vpop.trf.xlu0
        %v1409 = vpop.trf.xlu0
        %v1410 = vpop.trf.xlu0
        %v1412 = vsel %vm1228, %v1403, 0
        %1414 = vmatprep.subr.bf16.mxu0 0
        %1415 = vmatpush1.bf16.msra.mxu0 %v1208
        %1416 = vmatprep.subr.bf16.mxu0 0
        %1417 = vmatpush1.bf16.msra.mxu0 %v1209
        %1418 = vmatprep.subr.bf16.mxu0 0
        %1419 = vmatpush1.bf16.msra.mxu0 %v1210
        %1420 = vmatprep.subr.bf16.mxu0 0
        %1421 = vmatpush1.bf16.msra.mxu0 0
        %1422 = vmatprep.subr.bf16.mxu0 0
        %1423 = vmatpush1.bf16.msra.mxu0 0
        %1424 = vmatprep.subr.bf16.mxu0 0
        %1425 = vmatpush1.bf16.msra.mxu0 0
        %1426 = vmatprep.subr.bf16.mxu0 0
        %1427 = vmatpush1.bf16.msra.mxu0 0
        %1428 = vmatprep.subr.bf16.mxu0 0
        %1429 = vmatpush1.bf16.msra.mxu0 0
        %1430 = vmatprep.subr.bf16.mxu0 0
        %1431 = vmatpush1.bf16.msra.mxu0 0
        %1432 = vmatprep.subr.bf16.mxu0 0
        %1433 = vmatpush1.bf16.msra.mxu0 0
        %1434 = vmatprep.subr.bf16.mxu0 0
        %1435 = vmatpush1.bf16.msra.mxu0 0
        %1436 = vmatprep.subr.bf16.mxu0 0
        %1437 = vmatpush1.bf16.msra.mxu0 0
        %1438 = vmatprep.subr.bf16.mxu0 0
        %1439 = vmatpush1.bf16.msra.mxu0 0
        %1440 = vmatprep.subr.bf16.mxu0 0
        %1441 = vmatpush1.bf16.msra.mxu0 0
        %1442 = vmatprep.subr.bf16.mxu0 0
        %1443 = vmatpush1.bf16.msra.mxu0 0
        %1444 = vmatprep.subr.bf16.mxu0 0
        %1445 = vmatpush1.bf16.msra.mxu0 0
        %1446 = vmatprep.mubr.bf16.mxu0 0
        %1447 = vmatmul.mubr.bf16.gmra.mrb[0].mxu0 %v1412
        %v1448 = vpop.f32.mrb[0].mxu0
        %v1449 = vadd.f32 %v1211, %v1448
        %v1450 = vpop.f32.mrb[0].mxu0
        %v1451 = vpop.f32.mrb[0].mxu0
        %v1452 = vpop.f32.mrb[0].mxu0
        %1453 = vdwg.mxu0
        %s1454 = scalar_lea.vmem %s328, 24 [#allocation7]
        %1455 = vst.msk [vmem:[%s1454] sm:$0xff] %vm346, %v1449
        %s1456 = sand.u32 %s205, 1
        %s1457 = scalar_lea.sflag [#allocation4], %s1456
        %s1458 = sand.u32 %s205, 1
        %s1459 = smul.addr %s1458, 32
        %s1460 = scalar_lea.vmem [#allocation7], %s1459
        // Predicated region
        $region61: #{target_aware_self_attention.1} parent=51 // pred_check
          %p1461 = pneg %p215
        $region62: #{target_aware_self_attention.1} parent=51 // pred_check_branch
          %1463 = sbr.rel (%p1461) target = $region64
        $region63: #{target_aware_self_attention.1} parent=51 // pred_region
          %s1464 = smul.u32 4, %s24
          %s1466 = ssub.s32 512, 512
          %1467 = vsyncadd %s1457, %s1466
          %s1468 = smul.addr %s1464, 128
          %s1469 = scalar_lea.hbm %s8, %s1468
          %s1470 = sshll.u32 %s1460, 4
          %s1471 = int_to_ptr.vmem [resolvable:$true] %s1470
          %1476 = dma.vmem_to_hbm [thread:$0]  %s1471, 512, %s1469, %s1457, 128, 128, 8
        $region64: #{target_aware_self_attention.1} parent=51 // pred_fallthru
          _
      $region52: #{target_aware_self_attention.1} parent=5 // pred_fallthru
        _
      %p1477 = scmp.le.s32.totalorder 2, %s19
      // Predicated region
      $region65: #{target_aware_self_attention.1} parent=5 // pred_check
        %p1478 = pneg %p1477
      $region66: #{target_aware_self_attention.1} parent=5 // pred_check_branch
        %1480 = sbr.rel (%p1478) target = $region68
      $region67: #{target_aware_self_attention.1} parent=5 // pred_region
        %s1481 = ssub.s32 %s19, 2
        // Predicated region
        $region69: #{target_aware_self_attention.1} parent=67 // pred_check
          %p1482 = pneg %p221
        $region70: #{target_aware_self_attention.1} parent=67 // pred_check_branch
          %1484 = sbr.rel (%p1482) target = $region72
        $region71: #{target_aware_self_attention.1} parent=67 // pred_region
          %s1485 = sand.u32 %s206, 1
          %s1486 = scalar_lea.sflag [#allocation4], %s1485
          %s1487 = sand.u32 %s206, 1
          %s1488 = smul.addr %s1487, 32
          %s1489 = scalar_lea.vmem [#allocation7], %s1488
          %1490 = dma.done %s1486, 512
        $region72: #{target_aware_self_attention.1} parent=67 // pred_fallthru
          _
      $region68: #{target_aware_self_attention.1} parent=5 // pred_fallthru
        _
    $region6: #{target_aware_self_attention.1} parent=1 // loop_footer
      %s23 = sadd.s32 1, %s19
    $region7: #{target_aware_self_attention.1} parent=1 // loop_footer_branch
      %18 = sbr.rel target = $region3
    $region8: #{target_aware_self_attention.1} parent=1 // loop_exit
      _
    %1491 = vsyncpa [#allocation3], 1
    %s1492 = scalar_lea.sflag [#allocation3], 1
    %1493 = vsyncpa %s1492, 1
    %1494 = vsyncpa [#allocation4], 1
    %s1495 = scalar_lea.sflag [#allocation4], 1
    %1496 = vsyncpa %s1495, 1
    %1497 = vsyncpa [#allocation5], 1
    %s1498 = scalar_lea.sflag [#allocation5], 1
    %1499 = vsyncpa %s1498, 1

</llo_original>
